<compile_context>
chip_gen: v5e
topology: v5e:2x2
jax: 0.10.0
libtpu: 0.0.40
codegen_flags: <defaults>
</compile_context>

<pallas_src>
import math
import functools

import numpy as np
import jax
import jax.numpy as jnp
from jax import lax
from jax.experimental import pallas as pl
from jax.experimental.pallas import tpu as pltpu


# ----------------------------------- host-side helpers -----------------------------------

def _bilinear_resize_matrix(in_size: int, out_size: int) -> np.ndarray:
    """Matrix implementing PyTorch bilinear resize along one axis (align_corners=False)."""
    scale = in_size / out_size
    m = np.zeros((out_size, in_size), dtype=np.float32)
    for d in range(out_size):
        src = (d + 0.5) * scale - 0.5
        src = max(src, 0.0)
        i0 = min(int(np.floor(src)), in_size - 1)
        i1 = i0 + 1 if i0 < in_size - 1 else i0
        l1 = src - i0
        m[d, i0] += 1.0 - l1
        m[d, i1] += l1
    return m


def _pick_row_tile(H: int) -> int:
    """Row-tile size for the conv grid (must divide H; >= 3 rows for the 3x3 halo)."""
    for tr in (32, 16, 8):
        if H % tr == 0 and H // tr >= 2:
            return tr
    for tr in (32, 16, 8):
        if H % tr == 0:
            return tr
    assert H >= 3, "conv row tiling needs H >= 3"
    return H


def _padded_width(W: int, TR: int) -> int:
    """Padded row width Wp >= W+2 such that TR*Wp is a multiple of 128 (lane-dense tiles)."""
    unit = 128 // math.gcd(TR, 128)
    return ((W + 2 + unit - 1) // unit) * unit


def _prep_conv_weight(weight, compute_dtype):
    """(Cout, Cin, 3, 3) -> (Cout, 9*Cin) tap-major: col (3*dy+dx)*Cin + ci."""
    Cout, Cin = weight.shape[0], weight.shape[1]
    return weight.transpose(0, 2, 3, 1).reshape(Cout, 9 * Cin).astype(compute_dtype)


# ------------------------- conv3x3: one fused K=9*Cin MXU dot per tile -------------------------

def _conv3x3_kernel(*refs, Wp, TRWp, apply_relu, has_residual, cdt):
    if has_residual:
        x_main, x_halo, r_main, r_halo, w_ref, b_ref, o_ref, win_ref = refs
    else:
        x_main, x_halo, w_ref, b_ref, o_ref, win_ref = refs

    # Assemble the row-tile window (main tile + next-tile halo rows) once in VMEM,
    # already cast to the matmul compute dtype.
    win_ref[:, :TRWp] = x_main[0].astype(cdt)
    win_ref[:, TRWp:] = x_halo[0].astype(cdt)

    # The 9 taps of the 3x3 stencil are contiguous lane slices of the flat window,
    # shifted by dy*Wp + dx.  Stack them on the sublane axis and contract everything
    # with ONE MXU dot (K = 9*Cin) -- the MXU accumulates internally (no per-tap
    # VALU adds / MRF pops, maps onto v7x's MRB in-place accumulate).
    taps = []
    for dy in range(3):
        for dx in range(3):
            s = dy * Wp + dx
            taps.append(win_ref[:, s:s + TRWp])
    xcat = jnp.concatenate(taps, axis=0)                                   # (9*Cin, TR*Wp)
    acc = jnp.dot(w_ref[...], xcat, preferred_element_type=jnp.float32)    # (Cout, TR*Wp)
    acc = acc + b_ref[...]
    if apply_relu:
        acc = jnp.maximum(acc, 0.0)
    if has_residual:
        # fused `+ wide_feat`: the residual lives in the same padded flat layout,
        # offset by one row and one column; the slice crosses the main/halo boundary.
        res = jnp.concatenate([r_main[0, :, Wp + 1:], r_halo[0, :, :Wp + 1]], axis=1)
        acc = acc + res
    o_ref[0] = acc.astype(o_ref.dtype)


def conv3x3_pallas(x_flat, w9, b2, *, H, W, Wp, TR, apply_relu,
                   residual_flat=None, compute_dtype=jnp.bfloat16):
    """3x3 conv (stride 1, pad 1) on a zero-padded, row-major-flattened image.

    x_flat: (B, Cin, (H+TR)*Wp): the zero-padded (H+TR, Wp) image (1 top / TR-1 bottom /
    1 left zero rows|cols, zero right-pad out to Wp) flattened into one lane axis.
    Returns (B, Cout, H*Wp): lane-dense; valid pixels at q = oy*Wp + ox with ox < W
    (columns ox >= W are don't-care and are dropped downstream).
    """
    B, Cin, Lf = x_flat.shape
    T = H // TR
    TRWp = TR * Wp
    assert Lf == (T + 1) * TRWp
    Cout = w9.shape[0]

    kernel = functools.partial(
        _conv3x3_kernel, Wp=Wp, TRWp=TRWp, apply_relu=apply_relu,
        has_residual=residual_flat is not None, cdt=compute_dtype)

    in_specs = [
        pl.BlockSpec((1, Cin, TRWp), lambda b, t: (b, 0, t)),       # main row tile
        pl.BlockSpec((1, Cin, TRWp), lambda b, t: (b, 0, t + 1)),   # halo = next tile
    ]
    operands = [x_flat, x_flat]
    if residual_flat is not None:
        in_specs += [
            pl.BlockSpec((1, Cin, TRWp), lambda b, t: (b, 0, t)),
            pl.BlockSpec((1, Cin, TRWp), lambda b, t: (b, 0, t + 1)),
        ]
        operands += [residual_flat, residual_flat]
    in_specs += [
        pl.BlockSpec((Cout, 9 * Cin), lambda b, t: (0, 0)),         # fused tap weights
        pl.BlockSpec((Cout, 1), lambda b, t: (0, 0)),               # bias
    ]
    operands += [w9, b2]

    return pl.pallas_call(
        kernel,
        out_shape=jax.ShapeDtypeStruct((B, Cout, H * Wp), x_flat.dtype),
        grid_spec=pltpu.PrefetchScalarGridSpec(
            num_scalar_prefetch=0,
            grid=(B, T),
            in_specs=in_specs,
            out_specs=pl.BlockSpec((1, Cout, TRWp), lambda b, t: (b, 0, t)),
            scratch_shapes=[pltpu.VMEM((Cin, 2 * TRWp), compute_dtype)],
        ),
        compiler_params=pltpu.CompilerParams(
            dimension_semantics=("parallel", "parallel")),
    )(*operands)


# --------------------------------- AttentionFusion kernel ---------------------------------

def _attn_fusion_kernel(wide_ref, narrow_ref, dwq_ref, dwn_ref, dh_ref, uh_ref, uw_ref,
                        o_ref, qf_ref, kf_ref, o3_ref, *, C, H, W, Wp, Hp, h, w, cdt):
    CH = C * H
    S = h * w

    wide = wide_ref[0]          # (C*H, Wp) f32, conv1 output (cols >= W are don't-care)
    narrow = narrow_ref[0]      # (C*H, W)  f32

    # --- separable bilinear 0.25x downsample ---
    # (1) W-resize of the full-res operands: ONE big MXU dot each.  The wide-path
    #     matrix carries 1/sqrt(C) and has zero rows for the garbage conv columns.
    wq = jnp.dot(wide.astype(cdt), dwq_ref[...], preferred_element_type=jnp.float32)    # (C*H, w)
    nk = jnp.dot(narrow.astype(cdt), dwn_ref[...], preferred_element_type=jnp.float32)  # (C*H, w)
    # (2) H-resize of the 4x smaller intermediates, batched over C (negligible FLOPs;
    #     kept batched because their H axis lives on sublanes).
    dh_b = jnp.broadcast_to(dh_ref[...][None], (C, h, H))
    wq3 = jnp.einsum('chy,cyx->chx', dh_b, wq.reshape(C, H, w).astype(cdt),
                     preferred_element_type=jnp.float32)                                # (C, h, w)
    nk3 = jnp.einsum('chy,cyx->chx', dh_b, nk.reshape(C, H, w).astype(cdt),
                     preferred_element_type=jnp.float32)                                # (C, h, w)

    # flatten (C, h, w) -> (C, S) into VMEM scratch (s = i*w + j, matching torch .view).
    for i in range(h):
        qf_ref[:, i * w:(i + 1) * w] = wq3[:, i, :].astype(cdt)
        kf_ref[:, i * w:(i + 1) * w] = nk3[:, i, :].astype(cdt)
    qf = qf_ref[...]            # Q^T (pre-scaled), (C, S)
    kf = kf_ref[...]            # K = V,            (C, S)

    # logitsT[t, s] = sum_c K[c, t] * Q[c, s]; softmax over t (axis 0).
    # TODO(synk): flash-block over t for large S so no full (S, S) f32 intermediate
    # ever materializes (needed for big images on v7x's 64 MiB VMEM).
    logitsT = lax.dot_general(kf, qf, (((0,), (0,)), ((), ())),
                              preferred_element_type=jnp.float32)                       # (S, S)
    m = jnp.max(logitsT, axis=0, keepdims=True)
    p = jnp.exp(logitsT - m)
    l = jnp.sum(p, axis=0, keepdims=True)
    r = pl.reciprocal(l, approx=True)
    r = r * (2.0 - l * r)                    # one Newton step -> full f32 accuracy
    attnT = (p * r).astype(cdt)              # attnT[t, s] = attn[s, t]
    out_c = jnp.dot(kf, attnT, preferred_element_type=jnp.float32)                      # (C, S)

    # unflatten (C, S) -> (C, h, w)
    for i in range(h):
        o3_ref[:, i, :] = out_c[:, i * w:(i + 1) * w].astype(cdt)

    # --- separable bilinear upsample back to (H, W) ---
    uh_b = jnp.broadcast_to(uh_ref[...][None], (C, H, h))
    upH = jnp.einsum('cyi,cij->cyj', uh_b, o3_ref[...],
                     preferred_element_type=jnp.float32)                                # (C, H, w)
    up = jnp.dot(upH.reshape(CH, w).astype(cdt), uw_ref[...],
                 preferred_element_type=jnp.float32)                                    # (C*H, W)

    # fused residual with feat_wide (valid columns only), written directly in conv2's
    # zero-padded flat layout: image row y lands at padded row y+1, columns 1..W; all
    # pad rows/columns are zero-filled in-kernel (no XLA pad pass before conv2).
    fused = wide[:, :W] + up                                                            # (C*H, W)
    zl = jnp.zeros((CH, 1), jnp.float32)
    zr = jnp.zeros((CH, Wp - W - 1), jnp.float32)
    body = jnp.concatenate([zl, fused, zr], axis=1).reshape(C, H, Wp)
    o_ref[0, :, 0:1, :] = jnp.zeros((C, 1, Wp), o_ref.dtype)
    o_ref[0, :, 1:H + 1, :] = body.astype(o_ref.dtype)
    o_ref[0, :, H + 1:, :] = jnp.zeros((C, Hp - H - 1, Wp), o_ref.dtype)


def attention_fusion_pallas(wide_flat, narrow, *, C, H, W, Wp, Hp, compute_dtype):
    """wide_flat: (B, C, H*Wp) conv1 output; narrow: (B, C, H, W).

    Returns (B, C, Hp, Wp): attention-fused features already in conv2's padded layout.
    """
    B = wide_flat.shape[0]
    h, w = int(math.floor(H * 0.25)), int(math.floor(W * 0.25))
    S = h * w
    inv_scale = 1.0 / math.sqrt(C)

    Dh = _bilinear_resize_matrix(H, h)
    Dw = _bilinear_resize_matrix(W, w)
    Uh = _bilinear_resize_matrix(h, H)
    Uw = _bilinear_resize_matrix(w, W)

    dwq_np = np.zeros((Wp, w), np.float32)
    dwq_np[:W, :] = Dw.T * inv_scale          # fold 1/sqrt(C) into the Q-path W-resize;
                                              # zero rows drop the garbage conv columns.
    dwq = jnp.asarray(dwq_np, dtype=compute_dtype)
    dwn = jnp.asarray(np.ascontiguousarray(Dw.T), dtype=compute_dtype)
    dh = jnp.asarray(Dh, dtype=compute_dtype)
    uh = jnp.asarray(Uh, dtype=compute_dtype)
    uwT = jnp.asarray(np.ascontiguousarray(Uw.T), dtype=compute_dtype)

    wideCH = wide_flat.reshape(B, C * H, Wp)      # free row-major metadata reshapes
    narrCH = narrow.reshape(B, C * H, W)

    kernel = functools.partial(_attn_fusion_kernel, C=C, H=H, W=W, Wp=Wp, Hp=Hp,
                               h=h, w=w, cdt=compute_dtype)

    return pl.pallas_call(
        kernel,
        out_shape=jax.ShapeDtypeStruct((B, C, Hp, Wp), wide_flat.dtype),
        grid_spec=pltpu.PrefetchScalarGridSpec(
            num_scalar_prefetch=0,
            grid=(B,),
            in_specs=[
                pl.BlockSpec((1, C * H, Wp), lambda b: (b, 0, 0)),
                pl.BlockSpec((1, C * H, W), lambda b: (b, 0, 0)),
                pl.BlockSpec((Wp, w), lambda b: (0, 0)),    # tiny 1-D resize matrices
                pl.BlockSpec((W, w), lambda b: (0, 0)),
                pl.BlockSpec((h, H), lambda b: (0, 0)),
                pl.BlockSpec((H, h), lambda b: (0, 0)),
                pl.BlockSpec((w, W), lambda b: (0, 0)),
            ],
            out_specs=pl.BlockSpec((1, C, Hp, Wp), lambda b: (b, 0, 0, 0)),
            scratch_shapes=[
                pltpu.VMEM((C, S), compute_dtype),
                pltpu.VMEM((C, S), compute_dtype),
                pltpu.VMEM((C, h, w), compute_dtype),
            ],
        ),
        compiler_params=pltpu.CompilerParams(
            dimension_semantics=("parallel",),
            vmem_limit_bytes=48 * 1024 * 1024,   # whole-image per-batch blocks (see TODO)
        ),
    )(wideCH, narrCH, dwq, dwn, dh, uh, uwT)


# ----------------------------------- AttentionResBlock -----------------------------------

def attention_res_block(wide_feat, narrow_feat, params, *, compute_dtype=jnp.bfloat16):
    B, C, H, W = wide_feat.shape
    TR = _pick_row_tile(H)
    Wp = _padded_width(W, TR)
    Hp = H + TR                   # 1 top + (TR-1) bottom zero rows -> exactly T+1 row tiles

    w1 = _prep_conv_weight(params["w1"], compute_dtype)
    w2 = _prep_conv_weight(params["w2"], compute_dtype)
    b1 = params["b1"].reshape(-1, 1).astype(jnp.float32)
    b2 = params["b2"].reshape(-1, 1).astype(jnp.float32)

    # single pad pass; reused both as conv1's input and as conv2's fused residual.
    x1p = jnp.pad(wide_feat, ((0, 0), (0, 0), (1, TR - 1), (1, Wp - W - 1))
                  ).reshape(B, C, Hp * Wp)

    y1 = conv3x3_pallas(x1p, w1, b1, H=H, W=W, Wp=Wp, TR=TR, apply_relu=True,
                        compute_dtype=compute_dtype)                         # (B, C, H*Wp)

    fused_p = attention_fusion_pallas(y1, narrow_feat, C=C, H=H, W=W, Wp=Wp, Hp=Hp,
                                      compute_dtype=compute_dtype)           # (B, C, Hp, Wp)

    y2 = conv3x3_pallas(fused_p.reshape(B, C, Hp * Wp), w2, b2, H=H, W=W, Wp=Wp, TR=TR,
                        apply_relu=False, residual_flat=x1p,
                        compute_dtype=compute_dtype)                         # (B, C, H*Wp)

    # single crop of the lane-dense conv2(+residual) output back to (B, C, H, W).
    return y2.reshape(B, C, H, Wp)[:, :, :, :W]


# ----------------------------------- pure-JAX reference -----------------------------------

def _reference(wide, narrow, params):
    def conv(x, w, b):
        y = lax.conv_general_dilated(x, w, (1, 1), ((1, 1), (1, 1)),
                                     dimension_numbers=("NCHW", "OIHW", "NCHW"))
        return y + b.reshape(1, -1, 1, 1)

    B, C, H, W = wide.shape
    h, w_ = int(math.floor(H * 0.25)), int(math.floor(W * 0.25))
    Dh = jnp.asarray(_bilinear_resize_matrix(H, h))
    Dw = jnp.asarray(_bilinear_resize_matrix(W, w_))
    Uh = jnp.asarray(_bilinear_resize_matrix(h, H))
    Uw = jnp.asarray(_bilinear_resize_matrix(w_, W))

    out1 = jnp.maximum(conv(wide, params["w1"], params["b1"]), 0.0)
    w_ds = jnp.einsum('oh,bchw,pw->bcop', Dh, out1, Dw)
    n_ds = jnp.einsum('oh,bchw,pw->bcop', Dh, narrow, Dw)
    Q = w_ds.reshape(B, C, -1).transpose(0, 2, 1)
    K = n_ds.reshape(B, C, -1)
    attn = jax.nn.softmax(jnp.einsum('bsc,bct->bst', Q, K) / math.sqrt(C), axis=-1)
    o = jnp.einsum('bst,btc->bsc', attn, K.transpose(0, 2, 1))
    o = o.transpose(0, 2, 1).reshape(B, C, h, w_)
    o_up = jnp.einsum('Hh,bchw,Ww->bcHW', Uh, o, Uw)
    fused = out1 + o_up
    out2 = conv(fused, params["w2"], params["b2"])
    return out2 + wide


if __name__ == "__main__":
    B, C, H, W = 2, 4, 16, 16
    key = jax.random.PRNGKey(0)
    k = jax.random.split(key, 6)
    params = {
        "w1": jax.random.normal(k[0], (C, C, 3, 3), jnp.float32) * 0.1,
        "b1": jax.random.normal(k[1], (C,), jnp.float32) * 0.1,
        "w2": jax.random.normal(k[2], (C, C, 3, 3), jnp.float32) * 0.1,
        "b2": jax.random.normal(k[3], (C,), jnp.float32) * 0.1,
    }
    wide = jax.random.normal(k[4], (B, C, H, W), jnp.float32)
    narrow = jax.random.normal(k[5], (B, C, H, W), jnp.float32)

    ref = _reference(wide, narrow, params)

    # f32 compute path: tight check against the pure-JAX reference.
    run_f32 = jax.jit(functools.partial(attention_res_block, compute_dtype=jnp.float32))
    out_f32 = run_f32(wide, narrow, params)
    jax.block_until_ready(out_f32)
    np.testing.assert_allclose(np.asarray(out_f32), np.asarray(ref), rtol=2e-3, atol=2e-3)

    # bf16 (MXU fast path, f32 accumulation): looser tolerance from operand rounding.
    run_bf16 = jax.jit(functools.partial(attention_res_block, compute_dtype=jnp.bfloat16))
    out_bf16 = run_bf16(wide, narrow, params)
    jax.block_until_ready(out_bf16)
    np.testing.assert_allclose(np.asarray(out_bf16), np.asarray(ref), rtol=2e-2, atol=2e-2)

    print("KERNEL_OK")
</pallas_src>

<mosaic_0001>
module attributes {stable_mosaic.version = 11 : i64} {
  func.func @_conv3x3_kernel(%arg0: i32, %arg1: i32, %arg2: memref<1x4x256xf32, #tpu.memory_space<vmem>>, %arg3: memref<1x4x256xf32, #tpu.memory_space<vmem>>, %arg4: memref<4x36xf32, #tpu.memory_space<vmem>>, %arg5: memref<4x1xf32, #tpu.memory_space<vmem>>, %arg6: memref<1x4x256xf32, #tpu.memory_space<vmem>>, %arg7: memref<4x512xf32, #tpu.memory_space<vmem>>) attributes {dimension_semantics = [#tpu.dimension_semantics<parallel>, #tpu.dimension_semantics<parallel>], iteration_bounds = array<i64: 2, 2>, scalar_prefetch = 0 : i64, scratch_operands = 1 : i64, tpu.core_type = #tpu.core_type<tc>, window_params = [{transform_indices = @transform_0, window_bounds = array<i64: 1, 4, 256>}, {transform_indices = @transform_1, window_bounds = array<i64: 1, 4, 256>}, {pipeline_mode = #tpu.pipeline_mode<synchronous>, transform_indices = @transform_2, window_bounds = array<i64: 4, 36>}, {pipeline_mode = #tpu.pipeline_mode<synchronous>, transform_indices = @transform_3, window_bounds = array<i64: 4, 1>}, {transform_indices = @transform_4, window_bounds = array<i64: 1, 4, 256>}]} {
    %c0 = arith.constant 0 : index
    %c0_0 = arith.constant 0 : index
    %c0_1 = arith.constant 0 : index
    %0 = vector.load %arg2[%c0, %c0_0, %c0_1] : memref<1x4x256xf32, #tpu.memory_space<vmem>>, vector<1x4x256xf32>
    %1 = vector.shape_cast %0 : vector<1x4x256xf32> to vector<4x256xf32>
    %c0_2 = arith.constant 0 : index
    %c0_3 = arith.constant 0 : index
    %2 = vector.load %arg7[%c0_2, %c0_3] : memref<4x512xf32, #tpu.memory_space<vmem>>, vector<4x256xf32>
    tpu.vector_store %arg7[%c0_2, %c0_3], %1 {strides = array<i32>} : memref<4x512xf32, #tpu.memory_space<vmem>>, vector<4x256xf32>,
    %c0_4 = arith.constant 0 : index
    %c0_5 = arith.constant 0 : index
    %c0_6 = arith.constant 0 : index
    %3 = vector.load %arg3[%c0_4, %c0_5, %c0_6] : memref<1x4x256xf32, #tpu.memory_space<vmem>>, vector<1x4x256xf32>
    %4 = vector.shape_cast %3 : vector<1x4x256xf32> to vector<4x256xf32>
    %c0_7 = arith.constant 0 : index
    %c256 = arith.constant 256 : index
    %5 = vector.load %arg7[%c0_7, %c256] : memref<4x512xf32, #tpu.memory_space<vmem>>, vector<4x256xf32>
    tpu.vector_store %arg7[%c0_7, %c256], %4 {strides = array<i32>} : memref<4x512xf32, #tpu.memory_space<vmem>>, vector<4x256xf32>,
    %c0_8 = arith.constant 0 : index
    %c0_9 = arith.constant 0 : index
    %6 = vector.load %arg7[%c0_8, %c0_9] : memref<4x512xf32, #tpu.memory_space<vmem>>, vector<4x256xf32>
    %c0_10 = arith.constant 0 : index
    %c1 = arith.constant 1 : index
    %7 = vector.load %arg7[%c0_10, %c1] : memref<4x512xf32, #tpu.memory_space<vmem>>, vector<4x256xf32>
    %c0_11 = arith.constant 0 : index
    %c2 = arith.constant 2 : index
    %8 = vector.load %arg7[%c0_11, %c2] : memref<4x512xf32, #tpu.memory_space<vmem>>, vector<4x256xf32>
    %c0_12 = arith.constant 0 : index
    %c32 = arith.constant 32 : index
    %9 = vector.load %arg7[%c0_12, %c32] : memref<4x512xf32, #tpu.memory_space<vmem>>, vector<4x256xf32>
    %c0_13 = arith.constant 0 : index
    %c33 = arith.constant 33 : index
    %10 = vector.load %arg7[%c0_13, %c33] : memref<4x512xf32, #tpu.memory_space<vmem>>, vector<4x256xf32>
    %c0_14 = arith.constant 0 : index
    %c34 = arith.constant 34 : index
    %11 = vector.load %arg7[%c0_14, %c34] : memref<4x512xf32, #tpu.memory_space<vmem>>, vector<4x256xf32>
    %c0_15 = arith.constant 0 : index
    %c64 = arith.constant 64 : index
    %12 = vector.load %arg7[%c0_15, %c64] : memref<4x512xf32, #tpu.memory_space<vmem>>, vector<4x256xf32>
    %c0_16 = arith.constant 0 : index
    %c65 = arith.constant 65 : index
    %13 = vector.load %arg7[%c0_16, %c65] : memref<4x512xf32, #tpu.memory_space<vmem>>, vector<4x256xf32>
    %c0_17 = arith.constant 0 : index
    %c66 = arith.constant 66 : index
    %14 = vector.load %arg7[%c0_17, %c66] : memref<4x512xf32, #tpu.memory_space<vmem>>, vector<4x256xf32>
    %15 = tpu.concatenate %6, %7, %8, %9, %10, %11, %12, %13, %14 in 0 : vector<4x256xf32>, vector<4x256xf32>, vector<4x256xf32>, vector<4x256xf32>, vector<4x256xf32>, vector<4x256xf32>, vector<4x256xf32>, vector<4x256xf32>, vector<4x256xf32> -> vector<36x256xf32>
    %c0_18 = arith.constant 0 : index
    %c0_19 = arith.constant 0 : index
    %16 = vector.load %arg4[%c0_18, %c0_19] : memref<4x36xf32, #tpu.memory_space<vmem>>, vector<4x36xf32>
    %cst = arith.constant dense<0.000000e+00> : vector<4x256xf32>
    %17 = tpu.matmul %16, %15, %cst {dimension_numbers = #tpu.dot_dimension_numbers<[1], [0], [0], [1], [0, 0, 1, 1], [], []>} : vector<4x36xf32>, vector<36x256xf32>, vector<4x256xf32> -> vector<4x256xf32>
    %c0_20 = arith.constant 0 : index
    %c0_21 = arith.constant 0 : index
    %18 = vector.load %arg5[%c0_20, %c0_21] : memref<4x1xf32, #tpu.memory_space<vmem>>, vector<4x1xf32>
    %19 = vector.broadcast %18 : vector<4x1xf32> to vector<4x256xf32>
    %20 = arith.addf %17, %19 : vector<4x256xf32>
    %cst_22 = arith.constant 0.000000e+00 : f32
    %21 = vector.broadcast %cst_22 : f32 to vector<4x256xf32>
    %22 = arith.maximumf %20, %21 : vector<4x256xf32>
    %c0_23 = arith.constant 0 : index
    %c0_24 = arith.constant 0 : index
    %c0_25 = arith.constant 0 : index
    %23 = vector.load %arg6[%c0_23, %c0_24, %c0_25] : memref<1x4x256xf32, #tpu.memory_space<vmem>>, vector<1x4x256xf32>
    %24 = vector.shape_cast %23 : vector<1x4x256xf32> to vector<4x256xf32>
    %25 = vector.shape_cast %22 : vector<4x256xf32> to vector<1x4x256xf32>
    tpu.vector_store %arg6[%c0_23, %c0_24, %c0_25], %25 {strides = array<i32>} : memref<1x4x256xf32, #tpu.memory_space<vmem>>, vector<1x4x256xf32>,
    return
  }
  func.func @transform_0(%arg0: i32, %arg1: i32) -> (i32, i32, i32) {
    %c0_i32 = arith.constant 0 : i32
    %c0_i32_0 = arith.constant 0 : i32
    return %arg0, %c0_i32, %arg1 : i32, i32, i32
  }
  func.func @transform_1(%arg0: i32, %arg1: i32) -> (i32, i32, i32) {
    %c1_i32 = arith.constant 1 : i32
    %0 = arith.addi %arg1, %c1_i32 : i32
    %c0_i32 = arith.constant 0 : i32
    %c0_i32_0 = arith.constant 0 : i32
    return %arg0, %c0_i32, %0 : i32, i32, i32
  }
  func.func @transform_2(%arg0: i32, %arg1: i32) -> (i32, i32) {
    %c0_i32 = arith.constant 0 : i32
    %c0_i32_0 = arith.constant 0 : i32
    %c0_i32_1 = arith.constant 0 : i32
    return %c0_i32, %c0_i32_0 : i32, i32
  }
  func.func @transform_3(%arg0: i32, %arg1: i32) -> (i32, i32) {
    %c0_i32 = arith.constant 0 : i32
    %c0_i32_0 = arith.constant 0 : i32
    %c0_i32_1 = arith.constant 0 : i32
    return %c0_i32, %c0_i32_0 : i32, i32
  }
  func.func @transform_4(%arg0: i32, %arg1: i32) -> (i32, i32, i32) {
    %c0_i32 = arith.constant 0 : i32
    %c0_i32_0 = arith.constant 0 : i32
    return %arg0, %c0_i32, %arg1 : i32, i32, i32
  }
}

module attributes {stable_mosaic.version = 11 : i64} {
  func.func @_attn_fusion_kernel(%arg0: i32, %arg1: memref<1x64x32xf32, #tpu.memory_space<vmem>>, %arg2: memref<1x64x16xf32, #tpu.memory_space<vmem>>, %arg3: memref<32x4xf32, #tpu.memory_space<vmem>>, %arg4: memref<16x4xf32, #tpu.memory_space<vmem>>, %arg5: memref<4x16xf32, #tpu.memory_space<vmem>>, %arg6: memref<16x4xf32, #tpu.memory_space<vmem>>, %arg7: memref<4x16xf32, #tpu.memory_space<vmem>>, %arg8: memref<1x4x24x32xf32, #tpu.memory_space<vmem>>, %arg9: memref<4x16xf32, #tpu.memory_space<vmem>>, %arg10: memref<4x16xf32, #tpu.memory_space<vmem>>, %arg11: memref<4x4x4xf32, #tpu.memory_space<vmem>>) attributes {dimension_semantics = [#tpu.dimension_semantics<parallel>], iteration_bounds = array<i64: 2>, scalar_prefetch = 0 : i64, scratch_operands = 3 : i64, tpu.core_type = #tpu.core_type<tc>, window_params = [{transform_indices = @transform_0, window_bounds = array<i64: 1, 64, 32>}, {transform_indices = @transform_1, window_bounds = array<i64: 1, 64, 16>}, {pipeline_mode = #tpu.pipeline_mode<synchronous>, transform_indices = @transform_2, window_bounds = array<i64: 32, 4>}, {pipeline_mode = #tpu.pipeline_mode<synchronous>, transform_indices = @transform_3, window_bounds = array<i64: 16, 4>}, {pipeline_mode = #tpu.pipeline_mode<synchronous>, transform_indices = @transform_4, window_bounds = array<i64: 4, 16>}, {pipeline_mode = #tpu.pipeline_mode<synchronous>, transform_indices = @transform_5, window_bounds = array<i64: 16, 4>}, {pipeline_mode = #tpu.pipeline_mode<synchronous>, transform_indices = @transform_6, window_bounds = array<i64: 4, 16>}, {transform_indices = @transform_7, window_bounds = array<i64: 1, 4, 24, 32>}]} {
    %c0 = arith.constant 0 : index
    %c0_0 = arith.constant 0 : index
    %c0_1 = arith.constant 0 : index
    %0 = vector.load %arg1[%c0, %c0_0, %c0_1] : memref<1x64x32xf32, #tpu.memory_space<vmem>>, vector<1x64x32xf32>
    %1 = vector.shape_cast %0 : vector<1x64x32xf32> to vector<64x32xf32>
    %c0_2 = arith.constant 0 : index
    %c0_3 = arith.constant 0 : index
    %c0_4 = arith.constant 0 : index
    %2 = vector.load %arg2[%c0_2, %c0_3, %c0_4] : memref<1x64x16xf32, #tpu.memory_space<vmem>>, vector<1x64x16xf32>
    %3 = vector.shape_cast %2 : vector<1x64x16xf32> to vector<64x16xf32>
    %c0_5 = arith.constant 0 : index
    %c0_6 = arith.constant 0 : index
    %4 = vector.load %arg3[%c0_5, %c0_6] : memref<32x4xf32, #tpu.memory_space<vmem>>, vector<32x4xf32>
    %cst = arith.constant dense<0.000000e+00> : vector<64x4xf32>
    %5 = tpu.matmul %1, %4, %cst {dimension_numbers = #tpu.dot_dimension_numbers<[1], [0], [0], [1], [0, 0, 1, 1], [], []>} : vector<64x32xf32>, vector<32x4xf32>, vector<64x4xf32> -> vector<64x4xf32>
    %c0_7 = arith.constant 0 : index
    %c0_8 = arith.constant 0 : index
    %6 = vector.load %arg4[%c0_7, %c0_8] : memref<16x4xf32, #tpu.memory_space<vmem>>, vector<16x4xf32>
    %cst_9 = arith.constant dense<0.000000e+00> : vector<64x4xf32>
    %7 = tpu.matmul %3, %6, %cst_9 {dimension_numbers = #tpu.dot_dimension_numbers<[1], [0], [0], [1], [0, 0, 1, 1], [], []>} : vector<64x16xf32>, vector<16x4xf32>, vector<64x4xf32> -> vector<64x4xf32>
    %c0_10 = arith.constant 0 : index
    %c0_11 = arith.constant 0 : index
    %8 = vector.load %arg5[%c0_10, %c0_11] : memref<4x16xf32, #tpu.memory_space<vmem>>, vector<4x16xf32>
    %9 = vector.shape_cast %8 : vector<4x16xf32> to vector<1x4x16xf32>
    %10 = vector.shape_cast %9 : vector<1x4x16xf32> to vector<1x4x16xf32>
    %11 = vector.broadcast %10 : vector<1x4x16xf32> to vector<4x4x16xf32>
    %12 = vector.shape_cast %5 : vector<64x4xf32> to vector<4x16x4xf32>
    "tpu.trace_start"() <{level = 10 : i32, message = "chy,cyx->chx"}> : () -> ()
    %cst_12 = arith.constant dense<0.000000e+00> : vector<4x4x4xf32>
    %13 = tpu.matmul %11, %12, %cst_12 {dimension_numbers = #tpu.dot_dimension_numbers<[2], [1], [1], [2], [0, 0, 0, 1, 1, 2], [0], [0]>} : vector<4x4x16xf32>, vector<4x16x4xf32>, vector<4x4x4xf32> -> vector<4x4x4xf32>
    "tpu.trace_stop"() : () -> ()
    %14 = vector.shape_cast %7 : vector<64x4xf32> to vector<4x16x4xf32>
    "tpu.trace_start"() <{level = 10 : i32, message = "chy,cyx->chx"}> : () -> ()
    %cst_13 = arith.constant dense<0.000000e+00> : vector<4x4x4xf32>
    %15 = tpu.matmul %11, %14, %cst_13 {dimension_numbers = #tpu.dot_dimension_numbers<[2], [1], [1], [2], [0, 0, 0, 1, 1, 2], [0], [0]>} : vector<4x4x16xf32>, vector<4x16x4xf32>, vector<4x4x4xf32> -> vector<4x4x4xf32>
    "tpu.trace_stop"() : () -> ()
    %16 = vector.extract_strided_slice %13 {offsets = [0, 0, 0], sizes = [4, 1, 4], strides = [1, 1, 1]} : vector<4x4x4xf32> to vector<4x1x4xf32>
    %17 = vector.shape_cast %16 : vector<4x1x4xf32> to vector<4x4xf32>
    %c0_14 = arith.constant 0 : index
    %c0_15 = arith.constant 0 : index
    %18 = vector.load %arg9[%c0_14, %c0_15] : memref<4x16xf32, #tpu.memory_space<vmem>>, vector<4x4xf32>
    tpu.vector_store %arg9[%c0_14, %c0_15], %17 {strides = array<i32>} : memref<4x16xf32, #tpu.memory_space<vmem>>, vector<4x4xf32>,
    %19 = vector.extract_strided_slice %15 {offsets = [0, 0, 0], sizes = [4, 1, 4], strides = [1, 1, 1]} : vector<4x4x4xf32> to vector<4x1x4xf32>
    %20 = vector.shape_cast %19 : vector<4x1x4xf32> to vector<4x4xf32>
    %c0_16 = arith.constant 0 : index
    %c0_17 = arith.constant 0 : index
    %21 = vector.load %arg10[%c0_16, %c0_17] : memref<4x16xf32, #tpu.memory_space<vmem>>, vector<4x4xf32>
    tpu.vector_store %arg10[%c0_16, %c0_17], %20 {strides = array<i32>} : memref<4x16xf32, #tpu.memory_space<vmem>>, vector<4x4xf32>,
    %22 = vector.extract_strided_slice %13 {offsets = [0, 1, 0], sizes = [4, 1, 4], strides = [1, 1, 1]} : vector<4x4x4xf32> to vector<4x1x4xf32>
    %23 = vector.shape_cast %22 : vector<4x1x4xf32> to vector<4x4xf32>
    %c0_18 = arith.constant 0 : index
    %c4 = arith.constant 4 : index
    %24 = vector.load %arg9[%c0_18, %c4] : memref<4x16xf32, #tpu.memory_space<vmem>>, vector<4x4xf32>
    tpu.vector_store %arg9[%c0_18, %c4], %23 {strides = array<i32>} : memref<4x16xf32, #tpu.memory_space<vmem>>, vector<4x4xf32>,
    %25 = vector.extract_strided_slice %15 {offsets = [0, 1, 0], sizes = [4, 1, 4], strides = [1, 1, 1]} : vector<4x4x4xf32> to vector<4x1x4xf32>
    %26 = vector.shape_cast %25 : vector<4x1x4xf32> to vector<4x4xf32>
    %c0_19 = arith.constant 0 : index
    %c4_20 = arith.constant 4 : index
    %27 = vector.load %arg10[%c0_19, %c4_20] : memref<4x16xf32, #tpu.memory_space<vmem>>, vector<4x4xf32>
    tpu.vector_store %arg10[%c0_19, %c4_20], %26 {strides = array<i32>} : memref<4x16xf32, #tpu.memory_space<vmem>>, vector<4x4xf32>,
    %28 = vector.extract_strided_slice %13 {offsets = [0, 2, 0], sizes = [4, 1, 4], strides = [1, 1, 1]} : vector<4x4x4xf32> to vector<4x1x4xf32>
    %29 = vector.shape_cast %28 : vector<4x1x4xf32> to vector<4x4xf32>
    %c0_21 = arith.constant 0 : index
    %c8 = arith.constant 8 : index
    %30 = vector.load %arg9[%c0_21, %c8] : memref<4x16xf32, #tpu.memory_space<vmem>>, vector<4x4xf32>
    tpu.vector_store %arg9[%c0_21, %c8], %29 {strides = array<i32>} : memref<4x16xf32, #tpu.memory_space<vmem>>, vector<4x4xf32>,
    %31 = vector.extract_strided_slice %15 {offsets = [0, 2, 0], sizes = [4, 1, 4], strides = [1, 1, 1]} : vector<4x4x4xf32> to vector<4x1x4xf32>
    %32 = vector.shape_cast %31 : vector<4x1x4xf32> to vector<4x4xf32>
    %c0_22 = arith.constant 0 : index
    %c8_23 = arith.constant 8 : index
    %33 = vector.load %arg10[%c0_22, %c8_23] : memref<4x16xf32, #tpu.memory_space<vmem>>, vector<4x4xf32>
    tpu.vector_store %arg10[%c0_22, %c8_23], %32 {strides = array<i32>} : memref<4x16xf32, #tpu.memory_space<vmem>>, vector<4x4xf32>,
    %34 = vector.extract_strided_slice %13 {offsets = [0, 3, 0], sizes = [4, 1, 4], strides = [1, 1, 1]} : vector<4x4x4xf32> to vector<4x1x4xf32>
    %35 = vector.shape_cast %34 : vector<4x1x4xf32> to vector<4x4xf32>
    %c0_24 = arith.constant 0 : index
    %c12 = arith.constant 12 : index
    %36 = vector.load %arg9[%c0_24, %c12] : memref<4x16xf32, #tpu.memory_space<vmem>>, vector<4x4xf32>
    tpu.vector_store %arg9[%c0_24, %c12], %35 {strides = array<i32>} : memref<4x16xf32, #tpu.memory_space<vmem>>, vector<4x4xf32>,
    %37 = vector.extract_strided_slice %15 {offsets = [0, 3, 0], sizes = [4, 1, 4], strides = [1, 1, 1]} : vector<4x4x4xf32> to vector<4x1x4xf32>
    %38 = vector.shape_cast %37 : vector<4x1x4xf32> to vector<4x4xf32>
    %c0_25 = arith.constant 0 : index
    %c12_26 = arith.constant 12 : index
    %39 = vector.load %arg10[%c0_25, %c12_26] : memref<4x16xf32, #tpu.memory_space<vmem>>, vector<4x4xf32>
    tpu.vector_store %arg10[%c0_25, %c12_26], %38 {strides = array<i32>} : memref<4x16xf32, #tpu.memory_space<vmem>>, vector<4x4xf32>,
    %c0_27 = arith.constant 0 : index
    %c0_28 = arith.constant 0 : index
    %40 = vector.load %arg9[%c0_27, %c0_28] : memref<4x16xf32, #tpu.memory_space<vmem>>, vector<4x16xf32>
    %c0_29 = arith.constant 0 : index
    %c0_30 = arith.constant 0 : index
    %41 = vector.load %arg10[%c0_29, %c0_30] : memref<4x16xf32, #tpu.memory_space<vmem>>, vector<4x16xf32>
    %cst_31 = arith.constant dense<0.000000e+00> : vector<16x16xf32>
    %42 = tpu.matmul %41, %40, %cst_31 {dimension_numbers = #tpu.dot_dimension_numbers<[0], [0], [1], [1], [0, 1, 1, 1], [], []>} : vector<4x16xf32>, vector<4x16xf32>, vector<16x16xf32> -> vector<16x16xf32>
    %cst_32 = arith.constant dense<0xFF800000> : vector<16xf32>
    %43 = vector.multi_reduction <maximumf>, %42, %cst_32 [0] : vector<16x16xf32> to vector<16xf32>
    %44 = vector.shape_cast %43 : vector<16xf32> to vector<1x16xf32>
    %45 = vector.broadcast %44 : vector<1x16xf32> to vector<16x16xf32>
    %46 = arith.subf %42, %45 : vector<16x16xf32>
    %47 = math.exp %46 : vector<16x16xf32>
    %cst_33 = arith.constant dense<0.000000e+00> : vector<16xf32>
    %48 = vector.multi_reduction <add>, %47, %cst_33 [0] : vector<16x16xf32> to vector<16xf32>
    %49 = vector.shape_cast %48 : vector<16xf32> to vector<1x16xf32>
    %50 = tpu.reciprocal %49 {approx = true} : vector<1x16xf32> -> vector<1x16xf32>
    %51 = arith.mulf %49, %50 : vector<1x16xf32>
    %cst_34 = arith.constant 2.000000e+00 : f32
    %52 = vector.broadcast %cst_34 : f32 to vector<1x16xf32>
    %53 = arith.subf %52, %51 : vector<1x16xf32>
    %54 = arith.mulf %50, %53 : vector<1x16xf32>
    %55 = vector.broadcast %54 : vector<1x16xf32> to vector<16x16xf32>
    %56 = arith.mulf %47, %55 : vector<16x16xf32>
    %cst_35 = arith.constant dense<0.000000e+00> : vector<4x16xf32>
    %57 = tpu.matmul %41, %56, %cst_35 {dimension_numbers = #tpu.dot_dimension_numbers<[1], [0], [0], [1], [0, 0, 1, 1], [], []>} : vector<4x16xf32>, vector<16x16xf32>, vector<4x16xf32> -> vector<4x16xf32>
    %58 = vector.extract_strided_slice %57 {offsets = [0, 0], sizes = [4, 4], strides = [1, 1]} : vector<4x16xf32> to vector<4x4xf32>
    %c0_36 = arith.constant 0 : index
    %c0_37 = arith.constant 0 : index
    %c0_38 = arith.constant 0 : index
    %59 = vector.load %arg11[%c0_36, %c0_37, %c0_38] : memref<4x4x4xf32, #tpu.memory_space<vmem>>, vector<4x1x4xf32>
    %60 = vector.shape_cast %59 : vector<4x1x4xf32> to vector<4x4xf32>
    %61 = vector.shape_cast %58 : vector<4x4xf32> to vector<4x1x4xf32>
    tpu.vector_store %arg11[%c0_36, %c0_37, %c0_38], %61 {strides = array<i32>} : memref<4x4x4xf32, #tpu.memory_space<vmem>>, vector<4x1x4xf32>,
    %62 = vector.extract_strided_slice %57 {offsets = [0, 4], sizes = [4, 4], strides = [1, 1]} : vector<4x16xf32> to vector<4x4xf32>
    %c0_39 = arith.constant 0 : index
    %c1 = arith.constant 1 : index
    %c0_40 = arith.constant 0 : index
    %63 = vector.load %arg11[%c0_39, %c1, %c0_40] : memref<4x4x4xf32, #tpu.memory_space<vmem>>, vector<4x1x4xf32>
    %64 = vector.shape_cast %63 : vector<4x1x4xf32> to vector<4x4xf32>
    %65 = vector.shape_cast %62 : vector<4x4xf32> to vector<4x1x4xf32>
    tpu.vector_store %arg11[%c0_39, %c1, %c0_40], %65 {strides = array<i32>} : memref<4x4x4xf32, #tpu.memory_space<vmem>>, vector<4x1x4xf32>,
    %66 = vector.extract_strided_slice %57 {offsets = [0, 8], sizes = [4, 4], strides = [1, 1]} : vector<4x16xf32> to vector<4x4xf32>
    %c0_41 = arith.constant 0 : index
    %c2 = arith.constant 2 : index
    %c0_42 = arith.constant 0 : index
    %67 = vector.load %arg11[%c0_41, %c2, %c0_42] : memref<4x4x4xf32, #tpu.memory_space<vmem>>, vector<4x1x4xf32>
    %68 = vector.shape_cast %67 : vector<4x1x4xf32> to vector<4x4xf32>
    %69 = vector.shape_cast %66 : vector<4x4xf32> to vector<4x1x4xf32>
    tpu.vector_store %arg11[%c0_41, %c2, %c0_42], %69 {strides = array<i32>} : memref<4x4x4xf32, #tpu.memory_space<vmem>>, vector<4x1x4xf32>,
    %70 = vector.extract_strided_slice %57 {offsets = [0, 12], sizes = [4, 4], strides = [1, 1]} : vector<4x16xf32> to vector<4x4xf32>
    %c0_43 = arith.constant 0 : index
    %c3 = arith.constant 3 : index
    %c0_44 = arith.constant 0 : index
    %71 = vector.load %arg11[%c0_43, %c3, %c0_44] : memref<4x4x4xf32, #tpu.memory_space<vmem>>, vector<4x1x4xf32>
    %72 = vector.shape_cast %71 : vector<4x1x4xf32> to vector<4x4xf32>
    %73 = vector.shape_cast %70 : vector<4x4xf32> to vector<4x1x4xf32>
    tpu.vector_store %arg11[%c0_43, %c3, %c0_44], %73 {strides = array<i32>} : memref<4x4x4xf32, #tpu.memory_space<vmem>>, vector<4x1x4xf32>,
    %c0_45 = arith.constant 0 : index
    %c0_46 = arith.constant 0 : index
    %74 = vector.load %arg6[%c0_45, %c0_46] : memref<16x4xf32, #tpu.memory_space<vmem>>, vector<16x4xf32>
    %75 = vector.shape_cast %74 : vector<16x4xf32> to vector<1x16x4xf32>
    %76 = vector.shape_cast %75 : vector<1x16x4xf32> to vector<1x16x4xf32>
    %77 = vector.broadcast %76 : vector<1x16x4xf32> to vector<4x16x4xf32>
    %c0_47 = arith.constant 0 : index
    %c0_48 = arith.constant 0 : index
    %c0_49 = arith.constant 0 : index
    %78 = vector.load %arg11[%c0_47, %c0_48, %c0_49] : memref<4x4x4xf32, #tpu.memory_space<vmem>>, vector<4x4x4xf32>
    "tpu.trace_start"() <{level = 10 : i32, message = "cyi,cij->cyj"}> : () -> ()
    %cst_50 = arith.constant dense<0.000000e+00> : vector<4x16x4xf32>
    %79 = tpu.matmul %77, %78, %cst_50 {dimension_numbers = #tpu.dot_dimension_numbers<[2], [1], [1], [2], [0, 0, 0, 1, 1, 2], [0], [0]>} : vector<4x16x4xf32>, vector<4x4x4xf32>, vector<4x16x4xf32> -> vector<4x16x4xf32>
    "tpu.trace_stop"() : () -> ()
    %80 = vector.shape_cast %79 : vector<4x16x4xf32> to vector<64x4xf32>
    %c0_51 = arith.constant 0 : index
    %c0_52 = arith.constant 0 : index
    %81 = vector.load %arg7[%c0_51, %c0_52] : memref<4x16xf32, #tpu.memory_space<vmem>>, vector<4x16xf32>
    %cst_53 = arith.constant dense<0.000000e+00> : vector<64x16xf32>
    %82 = tpu.matmul %80, %81, %cst_53 {dimension_numbers = #tpu.dot_dimension_numbers<[1], [0], [0], [1], [0, 0, 1, 1], [], []>} : vector<64x4xf32>, vector<4x16xf32>, vector<64x16xf32> -> vector<64x16xf32>
    %83 = vector.extract_strided_slice %1 {offsets = [0, 0], sizes = [64, 16], strides = [1, 1]} : vector<64x32xf32> to vector<64x16xf32>
    %84 = arith.addf %83, %82 : vector<64x16xf32>
    %cst_54 = arith.constant 0.000000e+00 : f32
    %85 = vector.broadcast %cst_54 : f32 to vector<64x1xf32>
    %cst_55 = arith.constant 0.000000e+00 : f32
    %86 = vector.broadcast %cst_55 : f32 to vector<64x15xf32>
    %87 = tpu.concatenate %85, %84, %86 in 1 : vector<64x1xf32>, vector<64x16xf32>, vector<64x15xf32> -> vector<64x32xf32>
    %88 = vector.shape_cast %87 : vector<64x32xf32> to vector<4x16x32xf32>
    %cst_56 = arith.constant 0.000000e+00 : f32
    %89 = vector.broadcast %cst_56 : f32 to vector<4x1x32xf32>
    %c0_57 = arith.constant 0 : index
    %c0_58 = arith.constant 0 : index
    %c0_59 = arith.constant 0 : index
    %c0_60 = arith.constant 0 : index
    %90 = vector.load %arg8[%c0_57, %c0_58, %c0_59, %c0_60] : memref<1x4x24x32xf32, #tpu.memory_space<vmem>>, vector<1x4x1x32xf32>
    %91 = vector.shape_cast %90 : vector<1x4x1x32xf32> to vector<4x1x32xf32>
    %92 = vector.shape_cast %89 : vector<4x1x32xf32> to vector<1x4x1x32xf32>
    tpu.vector_store %arg8[%c0_57, %c0_58, %c0_59, %c0_60], %92 {strides = array<i32>} : memref<1x4x24x32xf32, #tpu.memory_space<vmem>>, vector<1x4x1x32xf32>,
    %c0_61 = arith.constant 0 : index
    %c0_62 = arith.constant 0 : index
    %c1_63 = arith.constant 1 : index
    %c0_64 = arith.constant 0 : index
    %93 = vector.load %arg8[%c0_61, %c0_62, %c1_63, %c0_64] : memref<1x4x24x32xf32, #tpu.memory_space<vmem>>, vector<1x4x16x32xf32>
    %94 = vector.shape_cast %93 : vector<1x4x16x32xf32> to vector<4x16x32xf32>
    %95 = vector.shape_cast %88 : vector<4x16x32xf32> to vector<1x4x16x32xf32>
    tpu.vector_store %arg8[%c0_61, %c0_62, %c1_63, %c0_64], %95 {strides = array<i32>} : memref<1x4x24x32xf32, #tpu.memory_space<vmem>>, vector<1x4x16x32xf32>,
    %cst_65 = arith.constant 0.000000e+00 : f32
    %96 = vector.broadcast %cst_65 : f32 to vector<4x7x32xf32>
    %c0_66 = arith.constant 0 : index
    %c0_67 = arith.constant 0 : index
    %c17 = arith.constant 17 : index
    %c0_68 = arith.constant 0 : index
    %97 = vector.load %arg8[%c0_66, %c0_67, %c17, %c0_68] : memref<1x4x24x32xf32, #tpu.memory_space<vmem>>, vector<1x4x7x32xf32>
    %98 = vector.shape_cast %97 : vector<1x4x7x32xf32> to vector<4x7x32xf32>
    %99 = vector.shape_cast %96 : vector<4x7x32xf32> to vector<1x4x7x32xf32>
    tpu.vector_store %arg8[%c0_66, %c0_67, %c17, %c0_68], %99 {strides = array<i32>} : memref<1x4x24x32xf32, #tpu.memory_space<vmem>>, vector<1x4x7x32xf32>,
    return
  }
  func.func @transform_0(%arg0: i32) -> (i32, i32, i32) {
    %c0_i32 = arith.constant 0 : i32
    %c0_i32_0 = arith.constant 0 : i32
    %c0_i32_1 = arith.constant 0 : i32
    return %arg0, %c0_i32, %c0_i32_0 : i32, i32, i32
  }
  func.func @transform_1(%arg0: i32) -> (i32, i32, i32) {
    %c0_i32 = arith.constant 0 : i32
    %c0_i32_0 = arith.constant 0 : i32
    %c0_i32_1 = arith.constant 0 : i32
    return %arg0, %c0_i32, %c0_i32_0 : i32, i32, i32
  }
  func.func @transform_2(%arg0: i32) -> (i32, i32) {
    %c0_i32 = arith.constant 0 : i32
    %c0_i32_0 = arith.constant 0 : i32
    %c0_i32_1 = arith.constant 0 : i32
    return %c0_i32, %c0_i32_0 : i32, i32
  }
  func.func @transform_3(%arg0: i32) -> (i32, i32) {
    %c0_i32 = arith.constant 0 : i32
    %c0_i32_0 = arith.constant 0 : i32
    %c0_i32_1 = arith.constant 0 : i32
    return %c0_i32, %c0_i32_0 : i32, i32
  }
  func.func @transform_4(%arg0: i32) -> (i32, i32) {
    %c0_i32 = arith.constant 0 : i32
    %c0_i32_0 = arith.constant 0 : i32
    %c0_i32_1 = arith.constant 0 : i32
    return %c0_i32, %c0_i32_0 : i32, i32
  }
  func.func @transform_5(%arg0: i32) -> (i32, i32) {
    %c0_i32 = arith.constant 0 : i32
    %c0_i32_0 = arith.constant 0 : i32
    %c0_i32_1 = arith.constant 0 : i32
    return %c0_i32, %c0_i32_0 : i32, i32
  }
  func.func @transform_6(%arg0: i32) -> (i32, i32) {
    %c0_i32 = arith.constant 0 : i32
    %c0_i32_0 = arith.constant 0 : i32
    %c0_i32_1 = arith.constant 0 : i32
    return %c0_i32, %c0_i32_0 : i32, i32
  }
  func.func @transform_7(%arg0: i32) -> (i32, i32, i32, i32) {
    %c0_i32 = arith.constant 0 : i32
    %c0_i32_0 = arith.constant 0 : i32
    %c0_i32_1 = arith.constant 0 : i32
    %c0_i32_2 = arith.constant 0 : i32
    return %arg0, %c0_i32, %c0_i32_0, %c0_i32_1 : i32, i32, i32, i32
  }
}

module attributes {stable_mosaic.version = 11 : i64} {
  func.func @_conv3x3_kernel(%arg0: i32, %arg1: i32, %arg2: memref<1x4x256xf32, #tpu.memory_space<vmem>>, %arg3: memref<1x4x256xf32, #tpu.memory_space<vmem>>, %arg4: memref<1x4x256xf32, #tpu.memory_space<vmem>>, %arg5: memref<1x4x256xf32, #tpu.memory_space<vmem>>, %arg6: memref<4x36xf32, #tpu.memory_space<vmem>>, %arg7: memref<4x1xf32, #tpu.memory_space<vmem>>, %arg8: memref<1x4x256xf32, #tpu.memory_space<vmem>>, %arg9: memref<4x512xf32, #tpu.memory_space<vmem>>) attributes {dimension_semantics = [#tpu.dimension_semantics<parallel>, #tpu.dimension_semantics<parallel>], iteration_bounds = array<i64: 2, 2>, scalar_prefetch = 0 : i64, scratch_operands = 1 : i64, tpu.core_type = #tpu.core_type<tc>, window_params = [{transform_indices = @transform_0, window_bounds = array<i64: 1, 4, 256>}, {transform_indices = @transform_1, window_bounds = array<i64: 1, 4, 256>}, {transform_indices = @transform_2, window_bounds = array<i64: 1, 4, 256>}, {transform_indices = @transform_3, window_bounds = array<i64: 1, 4, 256>}, {pipeline_mode = #tpu.pipeline_mode<synchronous>, transform_indices = @transform_4, window_bounds = array<i64: 4, 36>}, {pipeline_mode = #tpu.pipeline_mode<synchronous>, transform_indices = @transform_5, window_bounds = array<i64: 4, 1>}, {transform_indices = @transform_6, window_bounds = array<i64: 1, 4, 256>}]} {
    %c0 = arith.constant 0 : index
    %c0_0 = arith.constant 0 : index
    %c0_1 = arith.constant 0 : index
    %0 = vector.load %arg2[%c0, %c0_0, %c0_1] : memref<1x4x256xf32, #tpu.memory_space<vmem>>, vector<1x4x256xf32>
    %1 = vector.shape_cast %0 : vector<1x4x256xf32> to vector<4x256xf32>
    %c0_2 = arith.constant 0 : index
    %c0_3 = arith.constant 0 : index
    %2 = vector.load %arg9[%c0_2, %c0_3] : memref<4x512xf32, #tpu.memory_space<vmem>>, vector<4x256xf32>
    tpu.vector_store %arg9[%c0_2, %c0_3], %1 {strides = array<i32>} : memref<4x512xf32, #tpu.memory_space<vmem>>, vector<4x256xf32>,
    %c0_4 = arith.constant 0 : index
    %c0_5 = arith.constant 0 : index
    %c0_6 = arith.constant 0 : index
    %3 = vector.load %arg3[%c0_4, %c0_5, %c0_6] : memref<1x4x256xf32, #tpu.memory_space<vmem>>, vector<1x4x256xf32>
    %4 = vector.shape_cast %3 : vector<1x4x256xf32> to vector<4x256xf32>
    %c0_7 = arith.constant 0 : index
    %c256 = arith.constant 256 : index
    %5 = vector.load %arg9[%c0_7, %c256] : memref<4x512xf32, #tpu.memory_space<vmem>>, vector<4x256xf32>
    tpu.vector_store %arg9[%c0_7, %c256], %4 {strides = array<i32>} : memref<4x512xf32, #tpu.memory_space<vmem>>, vector<4x256xf32>,
    %c0_8 = arith.constant 0 : index
    %c0_9 = arith.constant 0 : index
    %6 = vector.load %arg9[%c0_8, %c0_9] : memref<4x512xf32, #tpu.memory_space<vmem>>, vector<4x256xf32>
    %c0_10 = arith.constant 0 : index
    %c1 = arith.constant 1 : index
    %7 = vector.load %arg9[%c0_10, %c1] : memref<4x512xf32, #tpu.memory_space<vmem>>, vector<4x256xf32>
    %c0_11 = arith.constant 0 : index
    %c2 = arith.constant 2 : index
    %8 = vector.load %arg9[%c0_11, %c2] : memref<4x512xf32, #tpu.memory_space<vmem>>, vector<4x256xf32>
    %c0_12 = arith.constant 0 : index
    %c32 = arith.constant 32 : index
    %9 = vector.load %arg9[%c0_12, %c32] : memref<4x512xf32, #tpu.memory_space<vmem>>, vector<4x256xf32>
    %c0_13 = arith.constant 0 : index
    %c33 = arith.constant 33 : index
    %10 = vector.load %arg9[%c0_13, %c33] : memref<4x512xf32, #tpu.memory_space<vmem>>, vector<4x256xf32>
    %c0_14 = arith.constant 0 : index
    %c34 = arith.constant 34 : index
    %11 = vector.load %arg9[%c0_14, %c34] : memref<4x512xf32, #tpu.memory_space<vmem>>, vector<4x256xf32>
    %c0_15 = arith.constant 0 : index
    %c64 = arith.constant 64 : index
    %12 = vector.load %arg9[%c0_15, %c64] : memref<4x512xf32, #tpu.memory_space<vmem>>, vector<4x256xf32>
    %c0_16 = arith.constant 0 : index
    %c65 = arith.constant 65 : index
    %13 = vector.load %arg9[%c0_16, %c65] : memref<4x512xf32, #tpu.memory_space<vmem>>, vector<4x256xf32>
    %c0_17 = arith.constant 0 : index
    %c66 = arith.constant 66 : index
    %14 = vector.load %arg9[%c0_17, %c66] : memref<4x512xf32, #tpu.memory_space<vmem>>, vector<4x256xf32>
    %15 = tpu.concatenate %6, %7, %8, %9, %10, %11, %12, %13, %14 in 0 : vector<4x256xf32>, vector<4x256xf32>, vector<4x256xf32>, vector<4x256xf32>, vector<4x256xf32>, vector<4x256xf32>, vector<4x256xf32>, vector<4x256xf32>, vector<4x256xf32> -> vector<36x256xf32>
    %c0_18 = arith.constant 0 : index
    %c0_19 = arith.constant 0 : index
    %16 = vector.load %arg6[%c0_18, %c0_19] : memref<4x36xf32, #tpu.memory_space<vmem>>, vector<4x36xf32>
    %cst = arith.constant dense<0.000000e+00> : vector<4x256xf32>
    %17 = tpu.matmul %16, %15, %cst {dimension_numbers = #tpu.dot_dimension_numbers<[1], [0], [0], [1], [0, 0, 1, 1], [], []>} : vector<4x36xf32>, vector<36x256xf32>, vector<4x256xf32> -> vector<4x256xf32>
    %c0_20 = arith.constant 0 : index
    %c0_21 = arith.constant 0 : index
    %18 = vector.load %arg7[%c0_20, %c0_21] : memref<4x1xf32, #tpu.memory_space<vmem>>, vector<4x1xf32>
    %19 = vector.broadcast %18 : vector<4x1xf32> to vector<4x256xf32>
    %20 = arith.addf %17, %19 : vector<4x256xf32>
    %c0_22 = arith.constant 0 : index
    %c0_23 = arith.constant 0 : index
    %c33_24 = arith.constant 33 : index
    %21 = vector.load %arg4[%c0_22, %c0_23, %c33_24] : memref<1x4x256xf32, #tpu.memory_space<vmem>>, vector<1x4x223xf32>
    %22 = vector.shape_cast %21 : vector<1x4x223xf32> to vector<4x223xf32>
    %c0_25 = arith.constant 0 : index
    %c0_26 = arith.constant 0 : index
    %c0_27 = arith.constant 0 : index
    %23 = vector.load %arg5[%c0_25, %c0_26, %c0_27] : memref<1x4x256xf32, #tpu.memory_space<vmem>>, vector<1x4x33xf32>
    %24 = vector.shape_cast %23 : vector<1x4x33xf32> to vector<4x33xf32>
    %25 = tpu.concatenate %22, %24 in 1 : vector<4x223xf32>, vector<4x33xf32> -> vector<4x256xf32>
    %26 = arith.addf %20, %25 : vector<4x256xf32>
    %c0_28 = arith.constant 0 : index
    %c0_29 = arith.constant 0 : index
    %c0_30 = arith.constant 0 : index
    %27 = vector.load %arg8[%c0_28, %c0_29, %c0_30] : memref<1x4x256xf32, #tpu.memory_space<vmem>>, vector<1x4x256xf32>
    %28 = vector.shape_cast %27 : vector<1x4x256xf32> to vector<4x256xf32>
    %29 = vector.shape_cast %26 : vector<4x256xf32> to vector<1x4x256xf32>
    tpu.vector_store %arg8[%c0_28, %c0_29, %c0_30], %29 {strides = array<i32>} : memref<1x4x256xf32, #tpu.memory_space<vmem>>, vector<1x4x256xf32>,
    return
  }
  func.func @transform_0(%arg0: i32, %arg1: i32) -> (i32, i32, i32) {
    %c0_i32 = arith.constant 0 : i32
    %c0_i32_0 = arith.constant 0 : i32
    return %arg0, %c0_i32, %arg1 : i32, i32, i32
  }
  func.func @transform_1(%arg0: i32, %arg1: i32) -> (i32, i32, i32) {
    %c1_i32 = arith.constant 1 : i32
    %0 = arith.addi %arg1, %c1_i32 : i32
    %c0_i32 = arith.constant 0 : i32
    %c0_i32_0 = arith.constant 0 : i32
    return %arg0, %c0_i32, %0 : i32, i32, i32
  }
  func.func @transform_2(%arg0: i32, %arg1: i32) -> (i32, i32, i32) {
    %c0_i32 = arith.constant 0 : i32
    %c0_i32_0 = arith.constant 0 : i32
    return %arg0, %c0_i32, %arg1 : i32, i32, i32
  }
  func.func @transform_3(%arg0: i32, %arg1: i32) -> (i32, i32, i32) {
    %c1_i32 = arith.constant 1 : i32
    %0 = arith.addi %arg1, %c1_i32 : i32
    %c0_i32 = arith.constant 0 : i32
    %c0_i32_0 = arith.constant 0 : i32
    return %arg0, %c0_i32, %0 : i32, i32, i32
  }
  func.func @transform_4(%arg0: i32, %arg1: i32) -> (i32, i32) {
    %c0_i32 = arith.constant 0 : i32
    %c0_i32_0 = arith.constant 0 : i32
    %c0_i32_1 = arith.constant 0 : i32
    return %c0_i32, %c0_i32_0 : i32, i32
  }
  func.func @transform_5(%arg0: i32, %arg1: i32) -> (i32, i32) {
    %c0_i32 = arith.constant 0 : i32
    %c0_i32_0 = arith.constant 0 : i32
    %c0_i32_1 = arith.constant 0 : i32
    return %c0_i32, %c0_i32_0 : i32, i32
  }
  func.func @transform_6(%arg0: i32, %arg1: i32) -> (i32, i32, i32) {
    %c0_i32 = arith.constant 0 : i32
    %c0_i32_0 = arith.constant 0 : i32
    return %arg0, %c0_i32, %arg1 : i32, i32, i32
  }
}

</mosaic_0001>

<llo_original>
// kernel: attention_res_block.5
$region0: #{attention_res_block.5}
  #allocation0 [shape = 'u32[]', space=smem, size = 0x4, offset = 0x4, fixed_abs, tag = 'smem constant byte address 0x4 - core index']
  #allocation1 [shape = 'u32[72,128]{1,0:T(1,128)}', space=vmem, size = 0x9000, scoped, tag = 'internal scratch']
  #allocation2 [shape = 'f32[4,512]{1,0:T(4,128)}', space=vmem, size = 0x2000, scoped, tag = 'scratch operand']
  %s0 = inlined_call_operand.vmem [shape: f32[2,4,768], index: 0, kind: input, shape index: {}, may-alias: {0,1}]
  %s1 = inlined_call_operand.vmem [shape: f32[2,4,768], index: 1, kind: input, shape index: {}, may-alias: {0,1}]
  %s2 = inlined_call_operand.vmem [shape: f32[2,4,768], index: 2, kind: input, shape index: {}, may-alias: {2,3}]
  %s3 = inlined_call_operand.vmem [shape: f32[2,4,768], index: 3, kind: input, shape index: {}, may-alias: {2,3}]
  %s4 = inlined_call_operand.vmem [shape: f32[4,36], index: 4, kind: input, shape index: {}]
  %s5 = inlined_call_operand.vmem [shape: f32[4,1], index: 5, kind: input, shape index: {}]
  %s6 = inlined_call_operand.vmem [shape: f32[2,4,512], index: 6, kind: output, shape index: {}]
  %s7 = sld [smem:[#allocation0]]
  $region57: #{attention_res_block.5} parent=0
    _
  %s9 = ssub.s32 1, %s7
  %s10 = scalar_select 0, %s9, %s7
  loop: start=0, step=1, limit=6
  $region2: #{attention_res_block.5} parent=0 // loop_pre_header
    _
  $region3: #{attention_res_block.5} parent=0 // loop_header
    %s12 = sphi 0, %s16
    %p13 = scmp.ge.s32.totalorder %s12, 6
    %s19 = sphi 0, %s31
    %s20 = sphi 0, %s27
    %s21 = sphi 0, %s19
    %s22 = sphi 0, %s20
    %s23 = sphi 0, %s21
    %s24 = sphi 0, %s22
    %s36 = sphi 0, %s38
    %s39 = sphi 0, %s36
    %s40 = sphi 0, %s39
    %s56 = sphi 0, %s40
    %s66 = sphi 0, %s68
    %s69 = sphi 0, %s66
    %s70 = sphi 0, %s69
    %s86 = sphi 0, %s70
    %s94 = sphi 0, %s96
    %s97 = sphi 0, %s94
    %s98 = sphi 0, %s97
    %s114 = sphi 0, %s98
    %s124 = sphi 0, %s126
    %s127 = sphi 0, %s124
    %s128 = sphi 0, %s127
    %s144 = sphi 0, %s128
    %s148 = sphi 0, %s148
    %s150 = sphi 0, %s148
    %s151 = sphi 0, %s150
    %s165 = sphi 0, %s151
    %s169 = sphi 0, %s169
    %s171 = sphi 0, %s169
    %s172 = sphi 0, %s171
    %s186 = sphi 0, %s172
    %s194 = sphi 0, %s196
    %s197 = sphi 0, %s194
    %s198 = sphi 0, %s197
    %s214 = sphi 0, %s198
  $region4: #{attention_res_block.5} parent=0 // loop_header_branch
    %15 = sbr.rel (%p13) target = $region8
  $region5: #{attention_res_block.5} parent=0 // loop_body
    %s17 = ssub.s32 %s12, 1
    %s18 = ssub.s32 %s12, 2
    %s25 = sadd.s32 1, %s20
    %p26 = scmp.ge.s32.totalorder %s25, 2
    %s27 = scalar_select %p26, 0, %s25
    %s28 = sadd.s32 1, %s19
    %s29 = scalar_select %p26, %s28, %s19
    %p30 = scmp.ge.s32.totalorder %s29, 2
    %s31 = scalar_select %p30, 0, %s29
    %s32 = ssub.s32 %s19, %s31
    %s33 = ssub.s32 %s20, %s27
    %s34 = sor.u32 %s32, %s33
    %p35 = scmp.eq.s32.totalorder %s34, 0
    %s37 = sadd.s32 %s36, 1
    %s38 = scalar_select %p35, %s36, %s37
    %p41 = pneg %p35
    %p42 = scmp.eq.s32.totalorder %s12, 3
    %p43 = por %p41, %p42
    %p44 = scmp.ne.s32.totalorder %s36, %s39
    %p45 = scmp.eq.s32.totalorder %s12, 0
    %p46 = por %p44, %p45
    %p47 = scmp.ne.s32.totalorder %s36, %s39
    %p48 = scmp.eq.s32.totalorder %s17, 3
    %p49 = por %p47, %p48
    %p50 = scmp.ne.s32.totalorder %s39, %s40
    %p51 = scmp.eq.s32.totalorder %s17, 0
    %p52 = por %p50, %p51
    %p53 = scmp.ne.s32.totalorder %s39, %s40
    %p54 = scmp.eq.s32.totalorder %s18, 3
    %p55 = por %p53, %p54
    %p57 = scmp.ne.s32.totalorder %s40, %s56
    %p58 = scmp.eq.s32.totalorder %s18, 0
    %p59 = por %p57, %p58
    %s60 = sadd.s32 %s20, 1
    %s61 = sadd.s32 %s27, 1
    %s62 = ssub.s32 %s19, %s31
    %s63 = ssub.s32 %s60, %s61
    %s64 = sor.u32 %s62, %s63
    %p65 = scmp.eq.s32.totalorder %s64, 0
    %s67 = sadd.s32 %s66, 1
    %s68 = scalar_select %p65, %s66, %s67
    %p71 = pneg %p65
    %p72 = scmp.eq.s32.totalorder %s12, 3
    %p73 = por %p71, %p72
    %p74 = scmp.ne.s32.totalorder %s66, %s69
    %p75 = scmp.eq.s32.totalorder %s12, 0
    %p76 = por %p74, %p75
    %p77 = scmp.ne.s32.totalorder %s66, %s69
    %p78 = scmp.eq.s32.totalorder %s17, 3
    %p79 = por %p77, %p78
    %p80 = scmp.ne.s32.totalorder %s69, %s70
    %p81 = scmp.eq.s32.totalorder %s17, 0
    %p82 = por %p80, %p81
    %p83 = scmp.ne.s32.totalorder %s69, %s70
    %p84 = scmp.eq.s32.totalorder %s18, 3
    %p85 = por %p83, %p84
    %p87 = scmp.ne.s32.totalorder %s70, %s86
    %p88 = scmp.eq.s32.totalorder %s18, 0
    %p89 = por %p87, %p88
    %s90 = ssub.s32 %s19, %s31
    %s91 = ssub.s32 %s20, %s27
    %s92 = sor.u32 %s90, %s91
    %p93 = scmp.eq.s32.totalorder %s92, 0
    %s95 = sadd.s32 %s94, 1
    %s96 = scalar_select %p93, %s94, %s95
    %p99 = pneg %p93
    %p100 = scmp.eq.s32.totalorder %s12, 3
    %p101 = por %p99, %p100
    %p102 = scmp.ne.s32.totalorder %s94, %s97
    %p103 = scmp.eq.s32.totalorder %s12, 0
    %p104 = por %p102, %p103
    %p105 = scmp.ne.s32.totalorder %s94, %s97
    %p106 = scmp.eq.s32.totalorder %s17, 3
    %p107 = por %p105, %p106
    %p108 = scmp.ne.s32.totalorder %s97, %s98
    %p109 = scmp.eq.s32.totalorder %s17, 0
    %p110 = por %p108, %p109
    %p111 = scmp.ne.s32.totalorder %s97, %s98
    %p112 = scmp.eq.s32.totalorder %s18, 3
    %p113 = por %p111, %p112
    %p115 = scmp.ne.s32.totalorder %s98, %s114
    %p116 = scmp.eq.s32.totalorder %s18, 0
    %p117 = por %p115, %p116
    %s118 = sadd.s32 %s20, 1
    %s119 = sadd.s32 %s27, 1
    %s120 = ssub.s32 %s19, %s31
    %s121 = ssub.s32 %s118, %s119
    %s122 = sor.u32 %s120, %s121
    %p123 = scmp.eq.s32.totalorder %s122, 0
    %s125 = sadd.s32 %s124, 1
    %s126 = scalar_select %p123, %s124, %s125
    %p129 = pneg %p123
    %p130 = scmp.eq.s32.totalorder %s12, 3
    %p131 = por %p129, %p130
    %p132 = scmp.ne.s32.totalorder %s124, %s127
    %p133 = scmp.eq.s32.totalorder %s12, 0
    %p134 = por %p132, %p133
    %p135 = scmp.ne.s32.totalorder %s124, %s127
    %p136 = scmp.eq.s32.totalorder %s17, 3
    %p137 = por %p135, %p136
    %p138 = scmp.ne.s32.totalorder %s127, %s128
    %p139 = scmp.eq.s32.totalorder %s17, 0
    %p140 = por %p138, %p139
    %p141 = scmp.ne.s32.totalorder %s127, %s128
    %p142 = scmp.eq.s32.totalorder %s18, 3
    %p143 = por %p141, %p142
    %p145 = scmp.ne.s32.totalorder %s128, %s144
    %p146 = scmp.eq.s32.totalorder %s18, 0
    %p147 = por %p145, %p146
    %s149 = sadd.s32 %s148, 1
    %p152 = scmp.eq.s32.totalorder %s12, 3
    %p153 = scmp.ne.s32.totalorder %s148, %s150
    %p154 = scmp.eq.s32.totalorder %s12, 0
    %p155 = por %p153, %p154
    %p156 = scmp.ne.s32.totalorder %s148, %s150
    %p157 = scmp.eq.s32.totalorder %s17, 3
    %p158 = por %p156, %p157
    %p159 = scmp.ne.s32.totalorder %s150, %s151
    %p160 = scmp.eq.s32.totalorder %s17, 0
    %p161 = por %p159, %p160
    %p162 = scmp.ne.s32.totalorder %s150, %s151
    %p163 = scmp.eq.s32.totalorder %s18, 3
    %p164 = por %p162, %p163
    %p166 = scmp.ne.s32.totalorder %s151, %s165
    %p167 = scmp.eq.s32.totalorder %s18, 0
    %p168 = por %p166, %p167
    %s170 = sadd.s32 %s169, 1
    %p173 = scmp.eq.s32.totalorder %s12, 3
    %p174 = scmp.ne.s32.totalorder %s169, %s171
    %p175 = scmp.eq.s32.totalorder %s12, 0
    %p176 = por %p174, %p175
    %p177 = scmp.ne.s32.totalorder %s169, %s171
    %p178 = scmp.eq.s32.totalorder %s17, 3
    %p179 = por %p177, %p178
    %p180 = scmp.ne.s32.totalorder %s171, %s172
    %p181 = scmp.eq.s32.totalorder %s17, 0
    %p182 = por %p180, %p181
    %p183 = scmp.ne.s32.totalorder %s171, %s172
    %p184 = scmp.eq.s32.totalorder %s18, 3
    %p185 = por %p183, %p184
    %p187 = scmp.ne.s32.totalorder %s172, %s186
    %p188 = scmp.eq.s32.totalorder %s18, 0
    %p189 = por %p187, %p188
    %s190 = ssub.s32 %s19, %s31
    %s191 = ssub.s32 %s20, %s27
    %s192 = sor.u32 %s190, %s191
    %p193 = scmp.eq.s32.totalorder %s192, 0
    %s195 = sadd.s32 %s194, 1
    %s196 = scalar_select %p193, %s194, %s195
    %p199 = pneg %p193
    %p200 = scmp.eq.s32.totalorder %s12, 3
    %p201 = por %p199, %p200
    %p202 = scmp.ne.s32.totalorder %s194, %s197
    %p203 = scmp.eq.s32.totalorder %s12, 0
    %p204 = por %p202, %p203
    %p205 = scmp.ne.s32.totalorder %s194, %s197
    %p206 = scmp.eq.s32.totalorder %s17, 3
    %p207 = por %p205, %p206
    %p208 = scmp.ne.s32.totalorder %s197, %s198
    %p209 = scmp.eq.s32.totalorder %s17, 0
    %p210 = por %p208, %p209
    %p211 = scmp.ne.s32.totalorder %s197, %s198
    %p212 = scmp.eq.s32.totalorder %s18, 3
    %p213 = por %p211, %p212
    %p215 = scmp.ne.s32.totalorder %s198, %s214
    %p216 = scmp.eq.s32.totalorder %s18, 0
    %p217 = por %p215, %p216
    %p218 = scmp.le.s32.totalorder 1, %s12
    %p219 = scmp.lt.s32.totalorder %s12, 5
    %p220 = pnand %p218, %p219
    %p221 = pneg %p220
    // Predicated region
    $region9: #{attention_res_block.5} parent=5 // pred_check
      _
    $region10: #{attention_res_block.5} parent=5 // pred_check_branch
      %223 = sbr.rel (%p220) target = $region12
    $region11: #{attention_res_block.5} parent=5 // pred_region
      %s224 = ssub.s32 %s12, 1
      // Predicated region
      $region13: #{attention_res_block.5} parent=11 // pred_check
        %p225 = pneg %p161
      $region14: #{attention_res_block.5} parent=11 // pred_check_branch
        %227 = sbr.rel (%p225) target = $region16
      $region15: #{attention_res_block.5} parent=11 // pred_region
        _
      $region16: #{attention_res_block.5} parent=11 // pred_fallthru
        _
      // Predicated region
      $region17: #{attention_res_block.5} parent=11 // pred_check
        %p228 = pneg %p182
      $region18: #{attention_res_block.5} parent=11 // pred_check_branch
        %230 = sbr.rel (%p228) target = $region20
      $region19: #{attention_res_block.5} parent=11 // pred_region
        _
      $region20: #{attention_res_block.5} parent=11 // pred_fallthru
        _
    $region12: #{attention_res_block.5} parent=5 // pred_fallthru
      _
    %p231 = scmp.lt.s32.totalorder %s12, 4
    // Predicated region
    $region21: #{attention_res_block.5} parent=5 // pred_check
      %p232 = pneg %p231
    $region22: #{attention_res_block.5} parent=5 // pred_check_branch
      %234 = sbr.rel (%p232) target = $region24
    $region23: #{attention_res_block.5} parent=5 // pred_region
      // Predicated region
      $region25: #{attention_res_block.5} parent=23 // pred_check
        %p235 = pneg %p46
      $region26: #{attention_res_block.5} parent=23 // pred_check_branch
        %237 = sbr.rel (%p235) target = $region28
      $region27: #{attention_res_block.5} parent=23 // pred_region
        %s238 = smul.u32 2, %s20
        %p239 = scmp.lt.s32.totalorder %s19, 1
        %s240 = scalar_select %p239, %s19, 1
        %p241 = scmp.lt.s32.totalorder %s238, 5
        %s242 = scalar_select %p241, %s238, 5
        %s243 = smul.addr %s240, 6
        %s244 = sadd.s32 %s242, %s243
        %s245 = smul.addr %s244, 4
        %s246 = scalar_lea.vmem %s0, %s245
        %s247 = smul.u32 2, %s20
      $region28: #{attention_res_block.5} parent=23 // pred_fallthru
        _
      // Predicated region
      $region29: #{attention_res_block.5} parent=23 // pred_check
        %p248 = pneg %p76
      $region30: #{attention_res_block.5} parent=23 // pred_check_branch
        %250 = sbr.rel (%p248) target = $region32
      $region31: #{attention_res_block.5} parent=23 // pred_region
        %s251 = sadd.s32 %s20, 1
        %s252 = smul.u32 2, %s251
        %p253 = scmp.lt.s32.totalorder %s19, 1
        %s254 = scalar_select %p253, %s19, 1
        %p255 = scmp.lt.s32.totalorder %s252, 5
        %s256 = scalar_select %p255, %s252, 5
        %s257 = smul.addr %s254, 6
        %s258 = sadd.s32 %s256, %s257
        %s259 = smul.addr %s258, 4
        %s260 = scalar_lea.vmem %s1, %s259
        %s261 = sadd.s32 %s20, 1
        %s262 = smul.u32 2, %s261
      $region32: #{attention_res_block.5} parent=23 // pred_fallthru
        _
      // Predicated region
      $region33: #{attention_res_block.5} parent=23 // pred_check
        %p263 = pneg %p104
      $region34: #{attention_res_block.5} parent=23 // pred_check_branch
        %265 = sbr.rel (%p263) target = $region36
      $region35: #{attention_res_block.5} parent=23 // pred_region
        %s266 = smul.u32 2, %s20
        %p267 = scmp.lt.s32.totalorder %s19, 1
        %s268 = scalar_select %p267, %s19, 1
        %p269 = scmp.lt.s32.totalorder %s266, 5
        %s270 = scalar_select %p269, %s266, 5
        %s271 = smul.addr %s268, 6
        %s272 = sadd.s32 %s270, %s271
        %s273 = smul.addr %s272, 4
        %s274 = scalar_lea.vmem %s2, %s273
        %s275 = smul.u32 2, %s20
      $region36: #{attention_res_block.5} parent=23 // pred_fallthru
        _
      // Predicated region
      $region37: #{attention_res_block.5} parent=23 // pred_check
        %p276 = pneg %p134
      $region38: #{attention_res_block.5} parent=23 // pred_check_branch
        %278 = sbr.rel (%p276) target = $region40
      $region39: #{attention_res_block.5} parent=23 // pred_region
        %s279 = sadd.s32 %s20, 1
        %s280 = smul.u32 2, %s279
        %p281 = scmp.lt.s32.totalorder %s19, 1
        %s282 = scalar_select %p281, %s19, 1
        %p283 = scmp.lt.s32.totalorder %s280, 5
        %s284 = scalar_select %p283, %s280, 5
        %s285 = smul.addr %s282, 6
        %s286 = sadd.s32 %s284, %s285
        %s287 = smul.addr %s286, 4
        %s288 = scalar_lea.vmem %s3, %s287
        %s289 = sadd.s32 %s20, 1
        %s290 = smul.u32 2, %s289
      $region40: #{attention_res_block.5} parent=23 // pred_fallthru
        _
    $region24: #{attention_res_block.5} parent=5 // pred_fallthru
      _
    %p291 = scmp.le.s32.totalorder 1, %s12
    %p292 = scmp.lt.s32.totalorder %s12, 5
    %p293 = pnand %p291, %p292
    %p294 = pneg %p293
    // Predicated region
    $region41: #{attention_res_block.5} parent=5 // pred_check
      _
    $region42: #{attention_res_block.5} parent=5 // pred_check_branch
      %296 = sbr.rel (%p293) target = $region44
    $region43: #{attention_res_block.5} parent=5 // pred_region
      %s297 = ssub.s32 %s12, 1
      %s298 = smul.u32 2, %s22
      %p299 = scmp.lt.s32.totalorder %s21, 1
      %s300 = scalar_select %p299, %s21, 1
      %p301 = scmp.lt.s32.totalorder %s298, 5
      %s302 = scalar_select %p301, %s298, 5
      %s303 = smul.addr %s300, 6
      %s304 = sadd.s32 %s302, %s303
      %s305 = smul.addr %s304, 4
      %s306 = scalar_lea.vmem %s0, %s305
      %p307 = pneg %p52
      %p308 = pneg %p49
      %s309 = sadd.s32 %s22, 1
      %s310 = smul.u32 2, %s309
      %p311 = scmp.lt.s32.totalorder %s21, 1
      %s312 = scalar_select %p311, %s21, 1
      %p313 = scmp.lt.s32.totalorder %s310, 5
      %s314 = scalar_select %p313, %s310, 5
      %s315 = smul.addr %s312, 6
      %s316 = sadd.s32 %s314, %s315
      %s317 = smul.addr %s316, 4
      %s318 = scalar_lea.vmem %s1, %s317
      %p319 = pneg %p82
      %p320 = pneg %p79
      %s321 = smul.u32 2, %s22
      %p322 = scmp.lt.s32.totalorder %s21, 1
      %s323 = scalar_select %p322, %s21, 1
      %p324 = scmp.lt.s32.totalorder %s321, 5
      %s325 = scalar_select %p324, %s321, 5
      %s326 = smul.addr %s323, 6
      %s327 = sadd.s32 %s325, %s326
      %s328 = smul.addr %s327, 4
      %s329 = scalar_lea.vmem %s2, %s328
      %p330 = pneg %p110
      %p331 = pneg %p107
      %s332 = sadd.s32 %s22, 1
      %s333 = smul.u32 2, %s332
      %p334 = scmp.lt.s32.totalorder %s21, 1
      %s335 = scalar_select %p334, %s21, 1
      %p336 = scmp.lt.s32.totalorder %s333, 5
      %s337 = scalar_select %p336, %s333, 5
      %s338 = smul.addr %s335, 6
      %s339 = sadd.s32 %s337, %s338
      %s340 = smul.addr %s339, 4
      %s341 = scalar_lea.vmem %s3, %s340
      %p342 = pneg %p140
      %p343 = pneg %p137
      %p344 = pneg %p161
      %p345 = pneg %p158
      %p346 = pneg %p182
      %p347 = pneg %p179
      %p348 = pneg %p210
      %p349 = pneg %p207
      %s350 = smul.u32 2, %s22
      %p351 = scmp.lt.s32.totalorder %s21, 1
      %s352 = scalar_select %p351, %s21, 1
      %p353 = scmp.lt.s32.totalorder %s350, 3
      %s354 = scalar_select %p353, %s350, 3
      %s355 = smul.addr %s352, 4
      %s356 = sadd.s32 %s354, %s355
      %s357 = smul.addr %s356, 4
      %s358 = scalar_lea.vmem %s6, %s357
      %s359 = smul.u32 2, %s22
      %p360 = scmp.lt.s32.totalorder %s21, 1
      %s361 = scalar_select %p360, %s21, 1
      %p362 = scmp.lt.s32.totalorder %s359, 5
      %s363 = scalar_select %p362, %s359, 5
      %s364 = smul.addr %s361, 6
      %s365 = sadd.s32 %s363, %s364
      %s366 = smul.addr %s365, 4
      %s367 = scalar_lea.vmem %s0, %s366
      %s368 = smul.u32 2, %s22
      %s369 = sadd.s32 %s22, 1
      %s370 = smul.u32 2, %s369
      %p371 = scmp.lt.s32.totalorder %s21, 1
      %s372 = scalar_select %p371, %s21, 1
      %p373 = scmp.lt.s32.totalorder %s370, 5
      %s374 = scalar_select %p373, %s370, 5
      %s375 = smul.addr %s372, 6
      %s376 = sadd.s32 %s374, %s375
      %s377 = smul.addr %s376, 4
      %s378 = scalar_lea.vmem %s1, %s377
      %s379 = sadd.s32 %s22, 1
      %s380 = smul.u32 2, %s379
      %s381 = smul.u32 2, %s22
      %p382 = scmp.lt.s32.totalorder %s21, 1
      %s383 = scalar_select %p382, %s21, 1
      %p384 = scmp.lt.s32.totalorder %s381, 5
      %s385 = scalar_select %p384, %s381, 5
      %s386 = smul.addr %s383, 6
      %s387 = sadd.s32 %s385, %s386
      %s388 = smul.addr %s387, 4
      %s389 = scalar_lea.vmem %s2, %s388
      %s390 = smul.u32 2, %s22
      %s391 = sadd.s32 %s22, 1
      %s392 = smul.u32 2, %s391
      %p393 = scmp.lt.s32.totalorder %s21, 1
      %s394 = scalar_select %p393, %s21, 1
      %p395 = scmp.lt.s32.totalorder %s392, 5
      %s396 = scalar_select %p395, %s392, 5
      %s397 = smul.addr %s394, 6
      %s398 = sadd.s32 %s396, %s397
      %s399 = smul.addr %s398, 4
      %s400 = scalar_lea.vmem %s3, %s399
      %s401 = sadd.s32 %s22, 1
      %s402 = smul.u32 2, %s401
      %s403 = smul.u32 2, %s22
      %p404 = scmp.lt.s32.totalorder %s21, 1
      %s405 = scalar_select %p404, %s21, 1
      %p406 = scmp.lt.s32.totalorder %s403, 3
      %s407 = scalar_select %p406, %s403, 3
      %s408 = smul.addr %s405, 4
      %s409 = sadd.s32 %s407, %s408
      %s410 = smul.addr %s409, 4
      %s411 = scalar_lea.vmem %s6, %s410
      %s412 = smul.u32 2, %s22
      %v413 = vld [vmem:[%s367] sm:$0xff]
      %414 = vst [vmem:[#allocation2] sm:$0xff] %v413
      %v415 = vld [vmem:[%s378] sm:$0xff]
      %416 = vst [vmem:[#allocation2 + $0x8] sm:$0xff] %v415
      %v417 = vld [vmem:[#allocation2] sm:$0xff]
      %v418 = vld [vmem:[#allocation2 + $0x8] sm:$0xf]
      %420 = vst [vmem:[#allocation1] ss:$2 sm:$0xff] %v417
      %v421 = vld.sshfl [vmem:[#allocation1] sm:$0xff pattern:$0x75316420]
      %v422 = vld.sshfl [vmem:[#allocation1 + $0x8] sm:$0xff pattern:$0x75316420]
      %s426 = scalar_lea.vmem [#allocation1], 1
      %427 = vst [vmem:[%s426] ss:$2 sm:$0xff] %v417
      %s428 = scalar_lea.vmem [#allocation1], 17
      %429 = vst [vmem:[%s428] ss:$2 sm:$0xff] %v418
      %v430 = vld.sshfl [vmem:[#allocation1] sm:$0xff pattern:$0x75316420]
      %v431 = vld.sshfl [vmem:[#allocation1 + $0x8] sm:$0xff pattern:$0x75316420]
      %v432 = vld.sshfl [vmem:[#allocation1 + $0x10] sm:$0xff pattern:$0x75316420]
      %433 = vrot.lane.b32.xlu0 %v430, 127
      %v434 = vpop.permute.xlu0 %433
      %435 = vrot.lane.b32.xlu0 %v431, 127
      %v436 = vpop.permute.xlu0 %435
      %437 = vrot.lane.b32.xlu0 %v432, 127
      %v438 = vpop.permute.xlu0 %437
      %vm439 = vcmask 1039360
      %v440 = vsel %vm439, %v434, %v436
      %v441 = vsel %vm439, %v436, %v438
      %444 = vst [vmem:[#allocation1] ss:$2 sm:$0xff] %v417
      %s445 = scalar_lea.vmem [#allocation1], 16
      %446 = vst [vmem:[%s445] ss:$2 sm:$0xff] %v418
      %v447 = vld.sshfl [vmem:[#allocation1] sm:$0xff pattern:$0x75316420]
      %v448 = vld.sshfl [vmem:[#allocation1 + $0x8] sm:$0xff pattern:$0x75316420]
      %v449 = vld.sshfl [vmem:[#allocation1 + $0x10] sm:$0xff pattern:$0x75316420]
      %450 = vrot.lane.b32.xlu0 %v447, 126
      %v451 = vpop.permute.xlu0 %450
      %452 = vrot.lane.b32.xlu0 %v448, 126
      %v453 = vpop.permute.xlu0 %452
      %454 = vrot.lane.b32.xlu0 %v449, 126
      %v455 = vpop.permute.xlu0 %454
      %vm456 = vcmask 1031168
      %v457 = vsel %vm456, %v451, %v453
      %v458 = vsel %vm456, %v453, %v455
      %s461 = scalar_lea.vmem [#allocation1], 1
      %462 = vst [vmem:[%s461] ss:$2 sm:$0xff] %v417
      %s463 = scalar_lea.vmem [#allocation1], 17
      %464 = vst [vmem:[%s463] ss:$2 sm:$0xff] %v418
      %v465 = vld.sshfl [vmem:[#allocation1] sm:$0xff pattern:$0x75316420]
      %v466 = vld.sshfl [vmem:[#allocation1 + $0x8] sm:$0xff pattern:$0x75316420]
      %v467 = vld.sshfl [vmem:[#allocation1 + $0x10] sm:$0xff pattern:$0x75316420]
      %468 = vrot.lane.b32.xlu0 %v465, 96
      %v469 = vpop.permute.xlu0 %468
      %470 = vrot.lane.b32.xlu0 %v466, 96
      %v471 = vpop.permute.xlu0 %470
      %472 = vrot.lane.b32.xlu0 %v467, 96
      %v473 = vpop.permute.xlu0 %472
      %vm474 = vcmask 785408
      %v475 = vsel %vm474, %v469, %v471
      %v476 = vsel %vm474, %v471, %v473
      %479 = vst [vmem:[#allocation1] ss:$2 sm:$0xff] %v417
      %s480 = scalar_lea.vmem [#allocation1], 16
      %481 = vst [vmem:[%s480] ss:$2 sm:$0xff] %v418
      %v482 = vld.sshfl [vmem:[#allocation1] sm:$0xff pattern:$0x75316420]
      %v483 = vld.sshfl [vmem:[#allocation1 + $0x8] sm:$0xff pattern:$0x75316420]
      %v484 = vld.sshfl [vmem:[#allocation1 + $0x10] sm:$0xff pattern:$0x75316420]
      %485 = vrot.lane.b32.xlu0 %v482, 95
      %v486 = vpop.permute.xlu0 %485
      %487 = vrot.lane.b32.xlu0 %v483, 95
      %v488 = vpop.permute.xlu0 %487
      %489 = vrot.lane.b32.xlu0 %v484, 95
      %v490 = vpop.permute.xlu0 %489
      %vm491 = vcmask 777216
      %v492 = vsel %vm491, %v486, %v488
      %v493 = vsel %vm491, %v488, %v490
      %s496 = scalar_lea.vmem [#allocation1], 1
      %497 = vst [vmem:[%s496] ss:$2 sm:$0xff] %v417
      %s498 = scalar_lea.vmem [#allocation1], 17
      %499 = vst [vmem:[%s498] ss:$2 sm:$0xff] %v418
      %v500 = vld.sshfl [vmem:[#allocation1] sm:$0xff pattern:$0x75316420]
      %v501 = vld.sshfl [vmem:[#allocation1 + $0x8] sm:$0xff pattern:$0x75316420]
      %v502 = vld.sshfl [vmem:[#allocation1 + $0x10] sm:$0xff pattern:$0x75316420]
      %503 = vrot.lane.b32.xlu0 %v500, 94
      %v504 = vpop.permute.xlu0 %503
      %505 = vrot.lane.b32.xlu0 %v501, 94
      %v506 = vpop.permute.xlu0 %505
      %507 = vrot.lane.b32.xlu0 %v502, 94
      %v508 = vpop.permute.xlu0 %507
      %vm509 = vcmask 769024
      %v510 = vsel %vm509, %v504, %v506
      %v511 = vsel %vm509, %v506, %v508
      %514 = vst [vmem:[#allocation1] ss:$2 sm:$0xff] %v417
      %s515 = scalar_lea.vmem [#allocation1], 16
      %516 = vst [vmem:[%s515] ss:$2 sm:$0xff] %v418
      %v517 = vld.sshfl [vmem:[#allocation1] sm:$0xff pattern:$0x75316420]
      %v518 = vld.sshfl [vmem:[#allocation1 + $0x8] sm:$0xff pattern:$0x75316420]
      %v519 = vld.sshfl [vmem:[#allocation1 + $0x10] sm:$0xff pattern:$0x75316420]
      %520 = vrot.lane.b32.xlu0 %v517, 64
      %v521 = vpop.permute.xlu0 %520
      %522 = vrot.lane.b32.xlu0 %v518, 64
      %v523 = vpop.permute.xlu0 %522
      %524 = vrot.lane.b32.xlu0 %v519, 64
      %v525 = vpop.permute.xlu0 %524
      %vm526 = vcmask 523264
      %v527 = vsel %vm526, %v521, %v523
      %v528 = vsel %vm526, %v523, %v525
      %s531 = scalar_lea.vmem [#allocation1], 1
      %532 = vst [vmem:[%s531] ss:$2 sm:$0xff] %v417
      %s533 = scalar_lea.vmem [#allocation1], 17
      %534 = vst [vmem:[%s533] ss:$2 sm:$0xff] %v418
      %v535 = vld.sshfl [vmem:[#allocation1] sm:$0xff pattern:$0x75316420]
      %v536 = vld.sshfl [vmem:[#allocation1 + $0x8] sm:$0xff pattern:$0x75316420]
      %v537 = vld.sshfl [vmem:[#allocation1 + $0x10] sm:$0xff pattern:$0x75316420]
      %538 = vrot.lane.b32.xlu0 %v535, 63
      %v539 = vpop.permute.xlu0 %538
      %540 = vrot.lane.b32.xlu0 %v536, 63
      %v541 = vpop.permute.xlu0 %540
      %542 = vrot.lane.b32.xlu0 %v537, 63
      %v543 = vpop.permute.xlu0 %542
      %vm544 = vcmask 515072
      %v545 = vsel %vm544, %v539, %v541
      %v546 = vsel %vm544, %v541, %v543
      %549 = vst [vmem:[#allocation1] ss:$2 sm:$0xff] %v417
      %s550 = scalar_lea.vmem [#allocation1], 16
      %551 = vst [vmem:[%s550] ss:$2 sm:$0xff] %v418
      %v552 = vld.sshfl [vmem:[#allocation1] sm:$0xff pattern:$0x75316420]
      %v553 = vld.sshfl [vmem:[#allocation1 + $0x8] sm:$0xff pattern:$0x75316420]
      %v554 = vld.sshfl [vmem:[#allocation1 + $0x10] sm:$0xff pattern:$0x75316420]
      %555 = vrot.lane.b32.xlu0 %v552, 62
      %v556 = vpop.permute.xlu0 %555
      %557 = vrot.lane.b32.xlu0 %v553, 62
      %v558 = vpop.permute.xlu0 %557
      %559 = vrot.lane.b32.xlu0 %v554, 62
      %v560 = vpop.permute.xlu0 %559
      %vm561 = vcmask 506880
      %v562 = vsel %vm561, %v556, %v558
      %v563 = vsel %vm561, %v558, %v560
      %vm564 = vcmask 1043456
      %v565 = vsel %vm564, %v421, %v440
      %v566 = vsel %vm564, %v422, %v441
      %v567 = vsel %vm564, %v457, %v475
      %v568 = vsel %vm564, %v458, %v476
      %v569 = vsel %vm564, %v492, %v510
      %v570 = vsel %vm564, %v493, %v511
      %v571 = vsel %vm564, %v527, %v545
      %v572 = vsel %vm564, %v528, %v546
      %v573 = vld [vmem:[%s4] sm:$0xf]
      %v574 = vld [vmem:[%s5] sm:$0xf]
      %576 = vset.pattern.permute.xlu0 0
      %577 = vperm.xlu0 %576, %v574
      %v578 = vpop.permute.xlu0 %577
      %vm580 = vcmask 293888
      %v582 = vsel %vm580, %v573, 0
      %v584 = vsel %vm564, %v562, 0
      %v586 = vsel %vm564, %v563, 0
      %588 = vmatpush.msra.mxu0 0.0
      %589 = vmatpush.msra.mxu0 0.0
      %590 = vmatpush.msra.mxu0 0.0
      %591 = vmatpush.msra.mxu0 0.0
      %592 = vmatpush.msra.mxu0 0.0
      %593 = vmatpush.msra.mxu0 0.0
      %594 = vmatpush.msra.mxu0 0.0
      %595 = vmatpush.msra.mxu0 0.0
      %596 = vmatpush.msra.mxu0 0.0
      %597 = vmatpush.msra.mxu0 0.0
      %598 = vmatpush.msra.mxu0 0.0
      %599 = vmatpush.msra.mxu0 %v584
      %600 = vmatpush.msra.mxu0 %v571
      %601 = vmatpush.msra.mxu0 %v569
      %602 = vmatpush.msra.mxu0 %v567
      %603 = vmatpush.msra.mxu0 %v565
      %604 = vmatmul.f32.gmra.mxu0 %v582
      %v605 = vpop.f32.mrf.mxu0
      %v606 = vadd.f32 %v578, %v605
      %607 = vdwg.mxu0
      %608 = vmatpush.msra.mxu0 0.0
      %609 = vmatpush.msra.mxu0 0.0
      %610 = vmatpush.msra.mxu0 0.0
      %611 = vmatpush.msra.mxu0 0.0
      %612 = vmatpush.msra.mxu0 0.0
      %613 = vmatpush.msra.mxu0 0.0
      %614 = vmatpush.msra.mxu0 0.0
      %615 = vmatpush.msra.mxu0 0.0
      %616 = vmatpush.msra.mxu0 0.0
      %617 = vmatpush.msra.mxu0 0.0
      %618 = vmatpush.msra.mxu0 0.0
      %619 = vmatpush.msra.mxu0 %v586
      %620 = vmatpush.msra.mxu0 %v572
      %621 = vmatpush.msra.mxu0 %v570
      %622 = vmatpush.msra.mxu0 %v568
      %623 = vmatpush.msra.mxu0 %v566
      %624 = vmatmul.f32.gmra.mxu0 %v582
      %v625 = vpop.f32.mrf.mxu0
      %v626 = vadd.f32 %v578, %v625
      %627 = vdwg.mxu0
      %v628 = vld [vmem:[%s389] sm:$0xff]
      %v629 = vld [vmem:[%s400] sm:$0xf]
      %631 = vst [vmem:[#allocation1] ss:$2 sm:$0xff] %v628
      %v632 = vld.sshfl [vmem:[#allocation1] sm:$0xff pattern:$0x75316420]
      %v633 = vld.sshfl [vmem:[#allocation1 + $0x8] sm:$0xff pattern:$0x75316420]
      %634 = vrot.lane.b32.xlu0 %v632, 95
      %v635 = vpop.permute.xlu0 %634
      %636 = vrot.lane.b32.xlu0 %v633, 95
      %v637 = vpop.permute.xlu0 %636
      %v638 = vsel %vm491, %v635, %v637
      %642 = vst [vmem:[#allocation1] ss:$2 sm:$0xff] %v629
      %v643 = vld.sshfl [vmem:[#allocation1] sm:$0xff pattern:$0x75316420]
      %644 = vrot.lane.b32.xlu0 %v643, 95
      %v645 = vpop.permute.xlu0 %644
      %v647 = vsel %vm491, %v637, %v645
      %v648 = vadd.f32 %v606, %v638
      %v649 = vadd.f32 %v626, %v647
      %v652 = vrot.slane %v649, 4
      %v653 = vsel %vm564, %v648, %v652
      %655 = vst [vmem:[%s411] sm:$0xff] %v653
      %s656 = smul.u32 2, %s22
      %p657 = scmp.lt.s32.totalorder %s21, 1
      %s658 = scalar_select %p657, %s21, 1
      %p659 = scmp.lt.s32.totalorder %s656, 3
      %s660 = scalar_select %p659, %s656, 3
      %s661 = smul.addr %s658, 4
      %s662 = sadd.s32 %s660, %s661
      %s663 = smul.addr %s662, 4
      %s664 = scalar_lea.vmem %s6, %s663
      // Predicated region
      $region45: #{attention_res_block.5} parent=43 // pred_check
        %p665 = pneg %p207
      $region46: #{attention_res_block.5} parent=43 // pred_check_branch
        %667 = sbr.rel (%p665) target = $region48
      $region47: #{attention_res_block.5} parent=43 // pred_region
        %s668 = smul.u32 2, %s22
      $region48: #{attention_res_block.5} parent=43 // pred_fallthru
        _
    $region44: #{attention_res_block.5} parent=5 // pred_fallthru
      _
    %p669 = scmp.le.s32.totalorder 2, %s12
    // Predicated region
    $region49: #{attention_res_block.5} parent=5 // pred_check
      %p670 = pneg %p669
    $region50: #{attention_res_block.5} parent=5 // pred_check_branch
      %672 = sbr.rel (%p670) target = $region52
    $region51: #{attention_res_block.5} parent=5 // pred_region
      %s673 = ssub.s32 %s12, 2
      // Predicated region
      $region53: #{attention_res_block.5} parent=51 // pred_check
        %p674 = pneg %p213
      $region54: #{attention_res_block.5} parent=51 // pred_check_branch
        %676 = sbr.rel (%p674) target = $region56
      $region55: #{attention_res_block.5} parent=51 // pred_region
        %s677 = smul.u32 2, %s24
        %p678 = scmp.lt.s32.totalorder %s23, 1
        %s679 = scalar_select %p678, %s23, 1
        %p680 = scmp.lt.s32.totalorder %s677, 3
        %s681 = scalar_select %p680, %s677, 3
        %s682 = smul.addr %s679, 4
        %s683 = sadd.s32 %s681, %s682
        %s684 = smul.addr %s683, 4
        %s685 = scalar_lea.vmem %s6, %s684
      $region56: #{attention_res_block.5} parent=51 // pred_fallthru
        _
    $region52: #{attention_res_block.5} parent=5 // pred_fallthru
      _
  $region6: #{attention_res_block.5} parent=0 // loop_footer
    %s16 = sadd.s32 1, %s12
  $region7: #{attention_res_block.5} parent=0 // loop_footer_branch
    %11 = sbr.rel target = $region3
  $region8: #{attention_res_block.5} parent=0 // loop_exit
    _

// kernel: attention_res_block.3
$region0: #{attention_res_block.3}
  #allocation0 [shape = 'u32[]', space=smem, size = 0x4, offset = 0x4, fixed_abs, tag = 'smem constant byte address 0x4 - core index']
  #allocation1 [shape = 'u32[72,128]{1,0:T(1,128)}', space=vmem, size = 0x9000, scoped, tag = 'internal scratch']
  #allocation2 [shape = 'f32[4,512]{1,0:T(4,128)}', space=vmem, size = 0x2000, scoped, tag = 'scratch operand']
  %s0 = inlined_call_operand.vmem [shape: f32[2,4,768], index: 0, kind: input, shape index: {}, may-alias: {0,1}]
  %s1 = inlined_call_operand.vmem [shape: f32[2,4,768], index: 1, kind: input, shape index: {}, may-alias: {0,1}]
  %s2 = inlined_call_operand.vmem [shape: f32[4,36], index: 2, kind: input, shape index: {}]
  %s3 = inlined_call_operand.vmem [shape: f32[4,1], index: 3, kind: input, shape index: {}]
  %s4 = inlined_call_operand.vmem [shape: f32[2,4,512], index: 4, kind: output, shape index: {}]
  %s5 = sld [smem:[#allocation0]]
  $region49: #{attention_res_block.3} parent=0
    _
  %s7 = ssub.s32 1, %s5
  %s8 = scalar_select 0, %s7, %s5
  loop: start=0, step=1, limit=6
  $region2: #{attention_res_block.3} parent=0 // loop_pre_header
    _
  $region3: #{attention_res_block.3} parent=0 // loop_header
    %s10 = sphi 0, %s14
    %p11 = scmp.ge.s32.totalorder %s10, 6
    %s17 = sphi 0, %s29
    %s18 = sphi 0, %s25
    %s19 = sphi 0, %s17
    %s20 = sphi 0, %s18
    %s21 = sphi 0, %s19
    %s22 = sphi 0, %s20
    %s34 = sphi 0, %s36
    %s37 = sphi 0, %s34
    %s38 = sphi 0, %s37
    %s54 = sphi 0, %s38
    %s64 = sphi 0, %s66
    %s67 = sphi 0, %s64
    %s68 = sphi 0, %s67
    %s84 = sphi 0, %s68
    %s88 = sphi 0, %s88
    %s90 = sphi 0, %s88
    %s91 = sphi 0, %s90
    %s105 = sphi 0, %s91
    %s109 = sphi 0, %s109
    %s111 = sphi 0, %s109
    %s112 = sphi 0, %s111
    %s126 = sphi 0, %s112
    %s134 = sphi 0, %s136
    %s137 = sphi 0, %s134
    %s138 = sphi 0, %s137
    %s154 = sphi 0, %s138
  $region4: #{attention_res_block.3} parent=0 // loop_header_branch
    %13 = sbr.rel (%p11) target = $region8
  $region5: #{attention_res_block.3} parent=0 // loop_body
    %s15 = ssub.s32 %s10, 1
    %s16 = ssub.s32 %s10, 2
    %s23 = sadd.s32 1, %s18
    %p24 = scmp.ge.s32.totalorder %s23, 2
    %s25 = scalar_select %p24, 0, %s23
    %s26 = sadd.s32 1, %s17
    %s27 = scalar_select %p24, %s26, %s17
    %p28 = scmp.ge.s32.totalorder %s27, 2
    %s29 = scalar_select %p28, 0, %s27
    %s30 = ssub.s32 %s17, %s29
    %s31 = ssub.s32 %s18, %s25
    %s32 = sor.u32 %s30, %s31
    %p33 = scmp.eq.s32.totalorder %s32, 0
    %s35 = sadd.s32 %s34, 1
    %s36 = scalar_select %p33, %s34, %s35
    %p39 = pneg %p33
    %p40 = scmp.eq.s32.totalorder %s10, 3
    %p41 = por %p39, %p40
    %p42 = scmp.ne.s32.totalorder %s34, %s37
    %p43 = scmp.eq.s32.totalorder %s10, 0
    %p44 = por %p42, %p43
    %p45 = scmp.ne.s32.totalorder %s34, %s37
    %p46 = scmp.eq.s32.totalorder %s15, 3
    %p47 = por %p45, %p46
    %p48 = scmp.ne.s32.totalorder %s37, %s38
    %p49 = scmp.eq.s32.totalorder %s15, 0
    %p50 = por %p48, %p49
    %p51 = scmp.ne.s32.totalorder %s37, %s38
    %p52 = scmp.eq.s32.totalorder %s16, 3
    %p53 = por %p51, %p52
    %p55 = scmp.ne.s32.totalorder %s38, %s54
    %p56 = scmp.eq.s32.totalorder %s16, 0
    %p57 = por %p55, %p56
    %s58 = sadd.s32 %s18, 1
    %s59 = sadd.s32 %s25, 1
    %s60 = ssub.s32 %s17, %s29
    %s61 = ssub.s32 %s58, %s59
    %s62 = sor.u32 %s60, %s61
    %p63 = scmp.eq.s32.totalorder %s62, 0
    %s65 = sadd.s32 %s64, 1
    %s66 = scalar_select %p63, %s64, %s65
    %p69 = pneg %p63
    %p70 = scmp.eq.s32.totalorder %s10, 3
    %p71 = por %p69, %p70
    %p72 = scmp.ne.s32.totalorder %s64, %s67
    %p73 = scmp.eq.s32.totalorder %s10, 0
    %p74 = por %p72, %p73
    %p75 = scmp.ne.s32.totalorder %s64, %s67
    %p76 = scmp.eq.s32.totalorder %s15, 3
    %p77 = por %p75, %p76
    %p78 = scmp.ne.s32.totalorder %s67, %s68
    %p79 = scmp.eq.s32.totalorder %s15, 0
    %p80 = por %p78, %p79
    %p81 = scmp.ne.s32.totalorder %s67, %s68
    %p82 = scmp.eq.s32.totalorder %s16, 3
    %p83 = por %p81, %p82
    %p85 = scmp.ne.s32.totalorder %s68, %s84
    %p86 = scmp.eq.s32.totalorder %s16, 0
    %p87 = por %p85, %p86
    %s89 = sadd.s32 %s88, 1
    %p92 = scmp.eq.s32.totalorder %s10, 3
    %p93 = scmp.ne.s32.totalorder %s88, %s90
    %p94 = scmp.eq.s32.totalorder %s10, 0
    %p95 = por %p93, %p94
    %p96 = scmp.ne.s32.totalorder %s88, %s90
    %p97 = scmp.eq.s32.totalorder %s15, 3
    %p98 = por %p96, %p97
    %p99 = scmp.ne.s32.totalorder %s90, %s91
    %p100 = scmp.eq.s32.totalorder %s15, 0
    %p101 = por %p99, %p100
    %p102 = scmp.ne.s32.totalorder %s90, %s91
    %p103 = scmp.eq.s32.totalorder %s16, 3
    %p104 = por %p102, %p103
    %p106 = scmp.ne.s32.totalorder %s91, %s105
    %p107 = scmp.eq.s32.totalorder %s16, 0
    %p108 = por %p106, %p107
    %s110 = sadd.s32 %s109, 1
    %p113 = scmp.eq.s32.totalorder %s10, 3
    %p114 = scmp.ne.s32.totalorder %s109, %s111
    %p115 = scmp.eq.s32.totalorder %s10, 0
    %p116 = por %p114, %p115
    %p117 = scmp.ne.s32.totalorder %s109, %s111
    %p118 = scmp.eq.s32.totalorder %s15, 3
    %p119 = por %p117, %p118
    %p120 = scmp.ne.s32.totalorder %s111, %s112
    %p121 = scmp.eq.s32.totalorder %s15, 0
    %p122 = por %p120, %p121
    %p123 = scmp.ne.s32.totalorder %s111, %s112
    %p124 = scmp.eq.s32.totalorder %s16, 3
    %p125 = por %p123, %p124
    %p127 = scmp.ne.s32.totalorder %s112, %s126
    %p128 = scmp.eq.s32.totalorder %s16, 0
    %p129 = por %p127, %p128
    %s130 = ssub.s32 %s17, %s29
    %s131 = ssub.s32 %s18, %s25
    %s132 = sor.u32 %s130, %s131
    %p133 = scmp.eq.s32.totalorder %s132, 0
    %s135 = sadd.s32 %s134, 1
    %s136 = scalar_select %p133, %s134, %s135
    %p139 = pneg %p133
    %p140 = scmp.eq.s32.totalorder %s10, 3
    %p141 = por %p139, %p140
    %p142 = scmp.ne.s32.totalorder %s134, %s137
    %p143 = scmp.eq.s32.totalorder %s10, 0
    %p144 = por %p142, %p143
    %p145 = scmp.ne.s32.totalorder %s134, %s137
    %p146 = scmp.eq.s32.totalorder %s15, 3
    %p147 = por %p145, %p146
    %p148 = scmp.ne.s32.totalorder %s137, %s138
    %p149 = scmp.eq.s32.totalorder %s15, 0
    %p150 = por %p148, %p149
    %p151 = scmp.ne.s32.totalorder %s137, %s138
    %p152 = scmp.eq.s32.totalorder %s16, 3
    %p153 = por %p151, %p152
    %p155 = scmp.ne.s32.totalorder %s138, %s154
    %p156 = scmp.eq.s32.totalorder %s16, 0
    %p157 = por %p155, %p156
    %p158 = scmp.le.s32.totalorder 1, %s10
    %p159 = scmp.lt.s32.totalorder %s10, 5
    %p160 = pnand %p158, %p159
    %p161 = pneg %p160
    // Predicated region
    $region9: #{attention_res_block.3} parent=5 // pred_check
      _
    $region10: #{attention_res_block.3} parent=5 // pred_check_branch
      %163 = sbr.rel (%p160) target = $region12
    $region11: #{attention_res_block.3} parent=5 // pred_region
      %s164 = ssub.s32 %s10, 1
      // Predicated region
      $region13: #{attention_res_block.3} parent=11 // pred_check
        %p165 = pneg %p101
      $region14: #{attention_res_block.3} parent=11 // pred_check_branch
        %167 = sbr.rel (%p165) target = $region16
      $region15: #{attention_res_block.3} parent=11 // pred_region
        _
      $region16: #{attention_res_block.3} parent=11 // pred_fallthru
        _
      // Predicated region
      $region17: #{attention_res_block.3} parent=11 // pred_check
        %p168 = pneg %p122
      $region18: #{attention_res_block.3} parent=11 // pred_check_branch
        %170 = sbr.rel (%p168) target = $region20
      $region19: #{attention_res_block.3} parent=11 // pred_region
        _
      $region20: #{attention_res_block.3} parent=11 // pred_fallthru
        _
    $region12: #{attention_res_block.3} parent=5 // pred_fallthru
      _
    %p171 = scmp.lt.s32.totalorder %s10, 4
    // Predicated region
    $region21: #{attention_res_block.3} parent=5 // pred_check
      %p172 = pneg %p171
    $region22: #{attention_res_block.3} parent=5 // pred_check_branch
      %174 = sbr.rel (%p172) target = $region24
    $region23: #{attention_res_block.3} parent=5 // pred_region
      // Predicated region
      $region25: #{attention_res_block.3} parent=23 // pred_check
        %p175 = pneg %p44
      $region26: #{attention_res_block.3} parent=23 // pred_check_branch
        %177 = sbr.rel (%p175) target = $region28
      $region27: #{attention_res_block.3} parent=23 // pred_region
        %s178 = smul.u32 2, %s18
        %p179 = scmp.lt.s32.totalorder %s17, 1
        %s180 = scalar_select %p179, %s17, 1
        %p181 = scmp.lt.s32.totalorder %s178, 5
        %s182 = scalar_select %p181, %s178, 5
        %s183 = smul.addr %s180, 6
        %s184 = sadd.s32 %s182, %s183
        %s185 = smul.addr %s184, 4
        %s186 = scalar_lea.vmem %s0, %s185
        %s187 = smul.u32 2, %s18
      $region28: #{attention_res_block.3} parent=23 // pred_fallthru
        _
      // Predicated region
      $region29: #{attention_res_block.3} parent=23 // pred_check
        %p188 = pneg %p74
      $region30: #{attention_res_block.3} parent=23 // pred_check_branch
        %190 = sbr.rel (%p188) target = $region32
      $region31: #{attention_res_block.3} parent=23 // pred_region
        %s191 = sadd.s32 %s18, 1
        %s192 = smul.u32 2, %s191
        %p193 = scmp.lt.s32.totalorder %s17, 1
        %s194 = scalar_select %p193, %s17, 1
        %p195 = scmp.lt.s32.totalorder %s192, 5
        %s196 = scalar_select %p195, %s192, 5
        %s197 = smul.addr %s194, 6
        %s198 = sadd.s32 %s196, %s197
        %s199 = smul.addr %s198, 4
        %s200 = scalar_lea.vmem %s1, %s199
        %s201 = sadd.s32 %s18, 1
        %s202 = smul.u32 2, %s201
      $region32: #{attention_res_block.3} parent=23 // pred_fallthru
        _
    $region24: #{attention_res_block.3} parent=5 // pred_fallthru
      _
    %p203 = scmp.le.s32.totalorder 1, %s10
    %p204 = scmp.lt.s32.totalorder %s10, 5
    %p205 = pnand %p203, %p204
    %p206 = pneg %p205
    // Predicated region
    $region33: #{attention_res_block.3} parent=5 // pred_check
      _
    $region34: #{attention_res_block.3} parent=5 // pred_check_branch
      %208 = sbr.rel (%p205) target = $region36
    $region35: #{attention_res_block.3} parent=5 // pred_region
      %s209 = ssub.s32 %s10, 1
      %s210 = smul.u32 2, %s20
      %p211 = scmp.lt.s32.totalorder %s19, 1
      %s212 = scalar_select %p211, %s19, 1
      %p213 = scmp.lt.s32.totalorder %s210, 5
      %s214 = scalar_select %p213, %s210, 5
      %s215 = smul.addr %s212, 6
      %s216 = sadd.s32 %s214, %s215
      %s217 = smul.addr %s216, 4
      %s218 = scalar_lea.vmem %s0, %s217
      %p219 = pneg %p50
      %p220 = pneg %p47
      %s221 = sadd.s32 %s20, 1
      %s222 = smul.u32 2, %s221
      %p223 = scmp.lt.s32.totalorder %s19, 1
      %s224 = scalar_select %p223, %s19, 1
      %p225 = scmp.lt.s32.totalorder %s222, 5
      %s226 = scalar_select %p225, %s222, 5
      %s227 = smul.addr %s224, 6
      %s228 = sadd.s32 %s226, %s227
      %s229 = smul.addr %s228, 4
      %s230 = scalar_lea.vmem %s1, %s229
      %p231 = pneg %p80
      %p232 = pneg %p77
      %p233 = pneg %p101
      %p234 = pneg %p98
      %p235 = pneg %p122
      %p236 = pneg %p119
      %p237 = pneg %p150
      %p238 = pneg %p147
      %s239 = smul.u32 2, %s20
      %p240 = scmp.lt.s32.totalorder %s19, 1
      %s241 = scalar_select %p240, %s19, 1
      %p242 = scmp.lt.s32.totalorder %s239, 3
      %s243 = scalar_select %p242, %s239, 3
      %s244 = smul.addr %s241, 4
      %s245 = sadd.s32 %s243, %s244
      %s246 = smul.addr %s245, 4
      %s247 = scalar_lea.vmem %s4, %s246
      %s248 = smul.u32 2, %s20
      %p249 = scmp.lt.s32.totalorder %s19, 1
      %s250 = scalar_select %p249, %s19, 1
      %p251 = scmp.lt.s32.totalorder %s248, 5
      %s252 = scalar_select %p251, %s248, 5
      %s253 = smul.addr %s250, 6
      %s254 = sadd.s32 %s252, %s253
      %s255 = smul.addr %s254, 4
      %s256 = scalar_lea.vmem %s0, %s255
      %s257 = smul.u32 2, %s20
      %s258 = sadd.s32 %s20, 1
      %s259 = smul.u32 2, %s258
      %p260 = scmp.lt.s32.totalorder %s19, 1
      %s261 = scalar_select %p260, %s19, 1
      %p262 = scmp.lt.s32.totalorder %s259, 5
      %s263 = scalar_select %p262, %s259, 5
      %s264 = smul.addr %s261, 6
      %s265 = sadd.s32 %s263, %s264
      %s266 = smul.addr %s265, 4
      %s267 = scalar_lea.vmem %s1, %s266
      %s268 = sadd.s32 %s20, 1
      %s269 = smul.u32 2, %s268
      %s270 = smul.u32 2, %s20
      %p271 = scmp.lt.s32.totalorder %s19, 1
      %s272 = scalar_select %p271, %s19, 1
      %p273 = scmp.lt.s32.totalorder %s270, 3
      %s274 = scalar_select %p273, %s270, 3
      %s275 = smul.addr %s272, 4
      %s276 = sadd.s32 %s274, %s275
      %s277 = smul.addr %s276, 4
      %s278 = scalar_lea.vmem %s4, %s277
      %s279 = smul.u32 2, %s20
      %v280 = vld [vmem:[%s256] sm:$0xff]
      %281 = vst [vmem:[#allocation2] sm:$0xff] %v280
      %v282 = vld [vmem:[%s267] sm:$0xff]
      %283 = vst [vmem:[#allocation2 + $0x8] sm:$0xff] %v282
      %v284 = vld [vmem:[#allocation2] sm:$0xff]
      %v285 = vld [vmem:[#allocation2 + $0x8] sm:$0xf]
      %287 = vst [vmem:[#allocation1] ss:$2 sm:$0xff] %v284
      %v288 = vld.sshfl [vmem:[#allocation1] sm:$0xff pattern:$0x75316420]
      %v289 = vld.sshfl [vmem:[#allocation1 + $0x8] sm:$0xff pattern:$0x75316420]
      %s293 = scalar_lea.vmem [#allocation1], 1
      %294 = vst [vmem:[%s293] ss:$2 sm:$0xff] %v284
      %s295 = scalar_lea.vmem [#allocation1], 17
      %296 = vst [vmem:[%s295] ss:$2 sm:$0xff] %v285
      %v297 = vld.sshfl [vmem:[#allocation1] sm:$0xff pattern:$0x75316420]
      %v298 = vld.sshfl [vmem:[#allocation1 + $0x8] sm:$0xff pattern:$0x75316420]
      %v299 = vld.sshfl [vmem:[#allocation1 + $0x10] sm:$0xff pattern:$0x75316420]
      %300 = vrot.lane.b32.xlu0 %v297, 127
      %v301 = vpop.permute.xlu0 %300
      %302 = vrot.lane.b32.xlu0 %v298, 127
      %v303 = vpop.permute.xlu0 %302
      %304 = vrot.lane.b32.xlu0 %v299, 127
      %v305 = vpop.permute.xlu0 %304
      %vm306 = vcmask 1039360
      %v307 = vsel %vm306, %v301, %v303
      %v308 = vsel %vm306, %v303, %v305
      %311 = vst [vmem:[#allocation1] ss:$2 sm:$0xff] %v284
      %s312 = scalar_lea.vmem [#allocation1], 16
      %313 = vst [vmem:[%s312] ss:$2 sm:$0xff] %v285
      %v314 = vld.sshfl [vmem:[#allocation1] sm:$0xff pattern:$0x75316420]
      %v315 = vld.sshfl [vmem:[#allocation1 + $0x8] sm:$0xff pattern:$0x75316420]
      %v316 = vld.sshfl [vmem:[#allocation1 + $0x10] sm:$0xff pattern:$0x75316420]
      %317 = vrot.lane.b32.xlu0 %v314, 126
      %v318 = vpop.permute.xlu0 %317
      %319 = vrot.lane.b32.xlu0 %v315, 126
      %v320 = vpop.permute.xlu0 %319
      %321 = vrot.lane.b32.xlu0 %v316, 126
      %v322 = vpop.permute.xlu0 %321
      %vm323 = vcmask 1031168
      %v324 = vsel %vm323, %v318, %v320
      %v325 = vsel %vm323, %v320, %v322
      %s328 = scalar_lea.vmem [#allocation1], 1
      %329 = vst [vmem:[%s328] ss:$2 sm:$0xff] %v284
      %s330 = scalar_lea.vmem [#allocation1], 17
      %331 = vst [vmem:[%s330] ss:$2 sm:$0xff] %v285
      %v332 = vld.sshfl [vmem:[#allocation1] sm:$0xff pattern:$0x75316420]
      %v333 = vld.sshfl [vmem:[#allocation1 + $0x8] sm:$0xff pattern:$0x75316420]
      %v334 = vld.sshfl [vmem:[#allocation1 + $0x10] sm:$0xff pattern:$0x75316420]
      %335 = vrot.lane.b32.xlu0 %v332, 96
      %v336 = vpop.permute.xlu0 %335
      %337 = vrot.lane.b32.xlu0 %v333, 96
      %v338 = vpop.permute.xlu0 %337
      %339 = vrot.lane.b32.xlu0 %v334, 96
      %v340 = vpop.permute.xlu0 %339
      %vm341 = vcmask 785408
      %v342 = vsel %vm341, %v336, %v338
      %v343 = vsel %vm341, %v338, %v340
      %346 = vst [vmem:[#allocation1] ss:$2 sm:$0xff] %v284
      %s347 = scalar_lea.vmem [#allocation1], 16
      %348 = vst [vmem:[%s347] ss:$2 sm:$0xff] %v285
      %v349 = vld.sshfl [vmem:[#allocation1] sm:$0xff pattern:$0x75316420]
      %v350 = vld.sshfl [vmem:[#allocation1 + $0x8] sm:$0xff pattern:$0x75316420]
      %v351 = vld.sshfl [vmem:[#allocation1 + $0x10] sm:$0xff pattern:$0x75316420]
      %352 = vrot.lane.b32.xlu0 %v349, 95
      %v353 = vpop.permute.xlu0 %352
      %354 = vrot.lane.b32.xlu0 %v350, 95
      %v355 = vpop.permute.xlu0 %354
      %356 = vrot.lane.b32.xlu0 %v351, 95
      %v357 = vpop.permute.xlu0 %356
      %vm358 = vcmask 777216
      %v359 = vsel %vm358, %v353, %v355
      %v360 = vsel %vm358, %v355, %v357
      %s363 = scalar_lea.vmem [#allocation1], 1
      %364 = vst [vmem:[%s363] ss:$2 sm:$0xff] %v284
      %s365 = scalar_lea.vmem [#allocation1], 17
      %366 = vst [vmem:[%s365] ss:$2 sm:$0xff] %v285
      %v367 = vld.sshfl [vmem:[#allocation1] sm:$0xff pattern:$0x75316420]
      %v368 = vld.sshfl [vmem:[#allocation1 + $0x8] sm:$0xff pattern:$0x75316420]
      %v369 = vld.sshfl [vmem:[#allocation1 + $0x10] sm:$0xff pattern:$0x75316420]
      %370 = vrot.lane.b32.xlu0 %v367, 94
      %v371 = vpop.permute.xlu0 %370
      %372 = vrot.lane.b32.xlu0 %v368, 94
      %v373 = vpop.permute.xlu0 %372
      %374 = vrot.lane.b32.xlu0 %v369, 94
      %v375 = vpop.permute.xlu0 %374
      %vm376 = vcmask 769024
      %v377 = vsel %vm376, %v371, %v373
      %v378 = vsel %vm376, %v373, %v375
      %381 = vst [vmem:[#allocation1] ss:$2 sm:$0xff] %v284
      %s382 = scalar_lea.vmem [#allocation1], 16
      %383 = vst [vmem:[%s382] ss:$2 sm:$0xff] %v285
      %v384 = vld.sshfl [vmem:[#allocation1] sm:$0xff pattern:$0x75316420]
      %v385 = vld.sshfl [vmem:[#allocation1 + $0x8] sm:$0xff pattern:$0x75316420]
      %v386 = vld.sshfl [vmem:[#allocation1 + $0x10] sm:$0xff pattern:$0x75316420]
      %387 = vrot.lane.b32.xlu0 %v384, 64
      %v388 = vpop.permute.xlu0 %387
      %389 = vrot.lane.b32.xlu0 %v385, 64
      %v390 = vpop.permute.xlu0 %389
      %391 = vrot.lane.b32.xlu0 %v386, 64
      %v392 = vpop.permute.xlu0 %391
      %vm393 = vcmask 523264
      %v394 = vsel %vm393, %v388, %v390
      %v395 = vsel %vm393, %v390, %v392
      %s398 = scalar_lea.vmem [#allocation1], 1
      %399 = vst [vmem:[%s398] ss:$2 sm:$0xff] %v284
      %s400 = scalar_lea.vmem [#allocation1], 17
      %401 = vst [vmem:[%s400] ss:$2 sm:$0xff] %v285
      %v402 = vld.sshfl [vmem:[#allocation1] sm:$0xff pattern:$0x75316420]
      %v403 = vld.sshfl [vmem:[#allocation1 + $0x8] sm:$0xff pattern:$0x75316420]
      %v404 = vld.sshfl [vmem:[#allocation1 + $0x10] sm:$0xff pattern:$0x75316420]
      %405 = vrot.lane.b32.xlu0 %v402, 63
      %v406 = vpop.permute.xlu0 %405
      %407 = vrot.lane.b32.xlu0 %v403, 63
      %v408 = vpop.permute.xlu0 %407
      %409 = vrot.lane.b32.xlu0 %v404, 63
      %v410 = vpop.permute.xlu0 %409
      %vm411 = vcmask 515072
      %v412 = vsel %vm411, %v406, %v408
      %v413 = vsel %vm411, %v408, %v410
      %416 = vst [vmem:[#allocation1] ss:$2 sm:$0xff] %v284
      %s417 = scalar_lea.vmem [#allocation1], 16
      %418 = vst [vmem:[%s417] ss:$2 sm:$0xff] %v285
      %v419 = vld.sshfl [vmem:[#allocation1] sm:$0xff pattern:$0x75316420]
      %v420 = vld.sshfl [vmem:[#allocation1 + $0x8] sm:$0xff pattern:$0x75316420]
      %v421 = vld.sshfl [vmem:[#allocation1 + $0x10] sm:$0xff pattern:$0x75316420]
      %422 = vrot.lane.b32.xlu0 %v419, 62
      %v423 = vpop.permute.xlu0 %422
      %424 = vrot.lane.b32.xlu0 %v420, 62
      %v425 = vpop.permute.xlu0 %424
      %426 = vrot.lane.b32.xlu0 %v421, 62
      %v427 = vpop.permute.xlu0 %426
      %vm428 = vcmask 506880
      %v429 = vsel %vm428, %v423, %v425
      %v430 = vsel %vm428, %v425, %v427
      %vm431 = vcmask 1043456
      %v432 = vsel %vm431, %v288, %v307
      %v433 = vsel %vm431, %v289, %v308
      %v434 = vsel %vm431, %v324, %v342
      %v435 = vsel %vm431, %v325, %v343
      %v436 = vsel %vm431, %v359, %v377
      %v437 = vsel %vm431, %v360, %v378
      %v438 = vsel %vm431, %v394, %v412
      %v439 = vsel %vm431, %v395, %v413
      %v440 = vld [vmem:[%s2] sm:$0xf]
      %v441 = vld [vmem:[%s3] sm:$0xf]
      %443 = vset.pattern.permute.xlu0 0
      %444 = vperm.xlu0 %443, %v441
      %v445 = vpop.permute.xlu0 %444
      %vm447 = vcmask 293888
      %v449 = vsel %vm447, %v440, 0
      %v451 = vsel %vm431, %v429, 0
      %v453 = vsel %vm431, %v430, 0
      %455 = vmatpush.msra.mxu0 0.0
      %456 = vmatpush.msra.mxu0 0.0
      %457 = vmatpush.msra.mxu0 0.0
      %458 = vmatpush.msra.mxu0 0.0
      %459 = vmatpush.msra.mxu0 0.0
      %460 = vmatpush.msra.mxu0 0.0
      %461 = vmatpush.msra.mxu0 0.0
      %462 = vmatpush.msra.mxu0 0.0
      %463 = vmatpush.msra.mxu0 0.0
      %464 = vmatpush.msra.mxu0 0.0
      %465 = vmatpush.msra.mxu0 0.0
      %466 = vmatpush.msra.mxu0 %v451
      %467 = vmatpush.msra.mxu0 %v438
      %468 = vmatpush.msra.mxu0 %v436
      %469 = vmatpush.msra.mxu0 %v434
      %470 = vmatpush.msra.mxu0 %v432
      %471 = vmatmul.f32.gmra.mxu0 %v449
      %v472 = vpop.f32.mrf.mxu0
      %v473 = vadd.f32 %v445, %v472
      %474 = vdwg.mxu0
      %475 = vmatpush.msra.mxu0 0.0
      %476 = vmatpush.msra.mxu0 0.0
      %477 = vmatpush.msra.mxu0 0.0
      %478 = vmatpush.msra.mxu0 0.0
      %479 = vmatpush.msra.mxu0 0.0
      %480 = vmatpush.msra.mxu0 0.0
      %481 = vmatpush.msra.mxu0 0.0
      %482 = vmatpush.msra.mxu0 0.0
      %483 = vmatpush.msra.mxu0 0.0
      %484 = vmatpush.msra.mxu0 0.0
      %485 = vmatpush.msra.mxu0 0.0
      %486 = vmatpush.msra.mxu0 %v453
      %487 = vmatpush.msra.mxu0 %v439
      %488 = vmatpush.msra.mxu0 %v437
      %489 = vmatpush.msra.mxu0 %v435
      %490 = vmatpush.msra.mxu0 %v433
      %491 = vmatmul.f32.gmra.mxu0 %v449
      %v492 = vpop.f32.mrf.mxu0
      %v493 = vadd.f32 %v445, %v492
      %494 = vdwg.mxu0
      %v495 = vmax.f32 %v473, 0.0
      %v496 = vmax.f32 %v493, 0.0
      %v499 = vrot.slane %v496, 4
      %v500 = vsel %vm431, %v495, %v499
      %502 = vst [vmem:[%s278] sm:$0xff] %v500
      %s503 = smul.u32 2, %s20
      %p504 = scmp.lt.s32.totalorder %s19, 1
      %s505 = scalar_select %p504, %s19, 1
      %p506 = scmp.lt.s32.totalorder %s503, 3
      %s507 = scalar_select %p506, %s503, 3
      %s508 = smul.addr %s505, 4
      %s509 = sadd.s32 %s507, %s508
      %s510 = smul.addr %s509, 4
      %s511 = scalar_lea.vmem %s4, %s510
      // Predicated region
      $region37: #{attention_res_block.3} parent=35 // pred_check
        %p512 = pneg %p147
      $region38: #{attention_res_block.3} parent=35 // pred_check_branch
        %514 = sbr.rel (%p512) target = $region40
      $region39: #{attention_res_block.3} parent=35 // pred_region
        %s515 = smul.u32 2, %s20
      $region40: #{attention_res_block.3} parent=35 // pred_fallthru
        _
    $region36: #{attention_res_block.3} parent=5 // pred_fallthru
      _
    %p516 = scmp.le.s32.totalorder 2, %s10
    // Predicated region
    $region41: #{attention_res_block.3} parent=5 // pred_check
      %p517 = pneg %p516
    $region42: #{attention_res_block.3} parent=5 // pred_check_branch
      %519 = sbr.rel (%p517) target = $region44
    $region43: #{attention_res_block.3} parent=5 // pred_region
      %s520 = ssub.s32 %s10, 2
      // Predicated region
      $region45: #{attention_res_block.3} parent=43 // pred_check
        %p521 = pneg %p153
      $region46: #{attention_res_block.3} parent=43 // pred_check_branch
        %523 = sbr.rel (%p521) target = $region48
      $region47: #{attention_res_block.3} parent=43 // pred_region
        %s524 = smul.u32 2, %s22
        %p525 = scmp.lt.s32.totalorder %s21, 1
        %s526 = scalar_select %p525, %s21, 1
        %p527 = scmp.lt.s32.totalorder %s524, 3
        %s528 = scalar_select %p527, %s524, 3
        %s529 = smul.addr %s526, 4
        %s530 = sadd.s32 %s528, %s529
        %s531 = smul.addr %s530, 4
        %s532 = scalar_lea.vmem %s4, %s531
      $region48: #{attention_res_block.3} parent=43 // pred_fallthru
        _
    $region44: #{attention_res_block.3} parent=5 // pred_fallthru
      _
  $region6: #{attention_res_block.3} parent=0 // loop_footer
    %s14 = sadd.s32 1, %s10
  $region7: #{attention_res_block.3} parent=0 // loop_footer_branch
    %9 = sbr.rel target = $region3
  $region8: #{attention_res_block.3} parent=0 // loop_exit
    _

// kernel: attention_res_block.4
$region0: #{attention_res_block.4}
  #allocation0 [shape = 'u32[]', space=smem, size = 0x4, offset = 0x4, fixed_abs, tag = 'smem constant byte address 0x4 - core index']
  #allocation1 [shape = 'u32[72,128]{1,0:T(1,128)}', space=vmem, size = 0x9000, scoped, tag = 'internal scratch']
  #allocation2 [shape = 'f32[4,16]{1,0:T(4,128)}', space=vmem, size = 0x800, scoped, tag = 'scratch operand']
  #allocation3 [shape = 'f32[4,16]{1,0:T(4,128)}', space=vmem, size = 0x800, scoped, tag = 'scratch operand']
  #allocation4 [shape = 'f32[4,4,4]{2,1,0:T(4,128)}', space=vmem, size = 0x2000, scoped, tag = 'scratch operand']
  %s0 = inlined_call_operand.vmem [shape: f32[2,64,32], index: 0, kind: input, shape index: {}]
  %s1 = inlined_call_operand.vmem [shape: f32[2,64,16], index: 1, kind: input, shape index: {}]
  %s2 = inlined_call_operand.vmem [shape: f32[32,4], index: 2, kind: input, shape index: {}]
  %s3 = inlined_call_operand.vmem [shape: f32[16,4], index: 3, kind: input, shape index: {}]
  %s4 = inlined_call_operand.vmem [shape: f32[4,16], index: 4, kind: input, shape index: {}]
  %s5 = inlined_call_operand.vmem [shape: f32[16,4], index: 5, kind: input, shape index: {}]
  %s6 = inlined_call_operand.vmem [shape: f32[4,16], index: 6, kind: input, shape index: {}]
  %s7 = inlined_call_operand.vmem [shape: f32[2,4,24,32], index: 7, kind: output, shape index: {}]
  %s8 = sld [smem:[#allocation0]]
  $region61: #{attention_res_block.4} parent=0
    _
  %s10 = ssub.s32 1, %s8
  %s11 = scalar_select 0, %s10, %s8
  loop: start=0, step=1, limit=4
  $region2: #{attention_res_block.4} parent=0 // loop_pre_header
    _
  $region3: #{attention_res_block.4} parent=0 // loop_header
    %s13 = sphi 0, %s17
    %p14 = scmp.ge.s32.totalorder %s13, 4
    %s23 = sphi 0, %s25
    %s26 = sphi 0, %s23
    %s27 = sphi 0, %s26
    %s43 = sphi 0, %s27
    %s49 = sphi 0, %s51
    %s52 = sphi 0, %s49
    %s53 = sphi 0, %s52
    %s69 = sphi 0, %s53
    %s73 = sphi 0, %s73
    %s75 = sphi 0, %s73
    %s76 = sphi 0, %s75
    %s90 = sphi 0, %s76
    %s94 = sphi 0, %s94
    %s96 = sphi 0, %s94
    %s97 = sphi 0, %s96
    %s111 = sphi 0, %s97
    %s115 = sphi 0, %s115
    %s117 = sphi 0, %s115
    %s118 = sphi 0, %s117
    %s132 = sphi 0, %s118
    %s136 = sphi 0, %s136
    %s138 = sphi 0, %s136
    %s139 = sphi 0, %s138
    %s153 = sphi 0, %s139
    %s157 = sphi 0, %s157
    %s159 = sphi 0, %s157
    %s160 = sphi 0, %s159
    %s174 = sphi 0, %s160
    %s180 = sphi 0, %s182
    %s183 = sphi 0, %s180
    %s184 = sphi 0, %s183
    %s200 = sphi 0, %s184
  $region4: #{attention_res_block.4} parent=0 // loop_header_branch
    %16 = sbr.rel (%p14) target = $region8
  $region5: #{attention_res_block.4} parent=0 // loop_body
    %s18 = ssub.s32 %s13, 1
    %s19 = ssub.s32 %s13, 2
    %s20 = sadd.s32 %s13, 1
    %s21 = ssub.s32 %s13, %s20
    %p22 = scmp.eq.s32.totalorder %s21, 0
    %s24 = sadd.s32 %s23, 1
    %s25 = scalar_select %p22, %s23, %s24
    %p28 = pneg %p22
    %p29 = scmp.eq.s32.totalorder %s13, 1
    %p30 = por %p28, %p29
    %p31 = scmp.ne.s32.totalorder %s23, %s26
    %p32 = scmp.eq.s32.totalorder %s13, 0
    %p33 = por %p31, %p32
    %p34 = scmp.ne.s32.totalorder %s23, %s26
    %p35 = scmp.eq.s32.totalorder %s18, 1
    %p36 = por %p34, %p35
    %p37 = scmp.ne.s32.totalorder %s26, %s27
    %p38 = scmp.eq.s32.totalorder %s18, 0
    %p39 = por %p37, %p38
    %p40 = scmp.ne.s32.totalorder %s26, %s27
    %p41 = scmp.eq.s32.totalorder %s19, 1
    %p42 = por %p40, %p41
    %p44 = scmp.ne.s32.totalorder %s27, %s43
    %p45 = scmp.eq.s32.totalorder %s19, 0
    %p46 = por %p44, %p45
    %s47 = ssub.s32 %s13, %s20
    %p48 = scmp.eq.s32.totalorder %s47, 0
    %s50 = sadd.s32 %s49, 1
    %s51 = scalar_select %p48, %s49, %s50
    %p54 = pneg %p48
    %p55 = scmp.eq.s32.totalorder %s13, 1
    %p56 = por %p54, %p55
    %p57 = scmp.ne.s32.totalorder %s49, %s52
    %p58 = scmp.eq.s32.totalorder %s13, 0
    %p59 = por %p57, %p58
    %p60 = scmp.ne.s32.totalorder %s49, %s52
    %p61 = scmp.eq.s32.totalorder %s18, 1
    %p62 = por %p60, %p61
    %p63 = scmp.ne.s32.totalorder %s52, %s53
    %p64 = scmp.eq.s32.totalorder %s18, 0
    %p65 = por %p63, %p64
    %p66 = scmp.ne.s32.totalorder %s52, %s53
    %p67 = scmp.eq.s32.totalorder %s19, 1
    %p68 = por %p66, %p67
    %p70 = scmp.ne.s32.totalorder %s53, %s69
    %p71 = scmp.eq.s32.totalorder %s19, 0
    %p72 = por %p70, %p71
    %s74 = sadd.s32 %s73, 1
    %p77 = scmp.eq.s32.totalorder %s13, 1
    %p78 = scmp.ne.s32.totalorder %s73, %s75
    %p79 = scmp.eq.s32.totalorder %s13, 0
    %p80 = por %p78, %p79
    %p81 = scmp.ne.s32.totalorder %s73, %s75
    %p82 = scmp.eq.s32.totalorder %s18, 1
    %p83 = por %p81, %p82
    %p84 = scmp.ne.s32.totalorder %s75, %s76
    %p85 = scmp.eq.s32.totalorder %s18, 0
    %p86 = por %p84, %p85
    %p87 = scmp.ne.s32.totalorder %s75, %s76
    %p88 = scmp.eq.s32.totalorder %s19, 1
    %p89 = por %p87, %p88
    %p91 = scmp.ne.s32.totalorder %s76, %s90
    %p92 = scmp.eq.s32.totalorder %s19, 0
    %p93 = por %p91, %p92
    %s95 = sadd.s32 %s94, 1
    %p98 = scmp.eq.s32.totalorder %s13, 1
    %p99 = scmp.ne.s32.totalorder %s94, %s96
    %p100 = scmp.eq.s32.totalorder %s13, 0
    %p101 = por %p99, %p100
    %p102 = scmp.ne.s32.totalorder %s94, %s96
    %p103 = scmp.eq.s32.totalorder %s18, 1
    %p104 = por %p102, %p103
    %p105 = scmp.ne.s32.totalorder %s96, %s97
    %p106 = scmp.eq.s32.totalorder %s18, 0
    %p107 = por %p105, %p106
    %p108 = scmp.ne.s32.totalorder %s96, %s97
    %p109 = scmp.eq.s32.totalorder %s19, 1
    %p110 = por %p108, %p109
    %p112 = scmp.ne.s32.totalorder %s97, %s111
    %p113 = scmp.eq.s32.totalorder %s19, 0
    %p114 = por %p112, %p113
    %s116 = sadd.s32 %s115, 1
    %p119 = scmp.eq.s32.totalorder %s13, 1
    %p120 = scmp.ne.s32.totalorder %s115, %s117
    %p121 = scmp.eq.s32.totalorder %s13, 0
    %p122 = por %p120, %p121
    %p123 = scmp.ne.s32.totalorder %s115, %s117
    %p124 = scmp.eq.s32.totalorder %s18, 1
    %p125 = por %p123, %p124
    %p126 = scmp.ne.s32.totalorder %s117, %s118
    %p127 = scmp.eq.s32.totalorder %s18, 0
    %p128 = por %p126, %p127
    %p129 = scmp.ne.s32.totalorder %s117, %s118
    %p130 = scmp.eq.s32.totalorder %s19, 1
    %p131 = por %p129, %p130
    %p133 = scmp.ne.s32.totalorder %s118, %s132
    %p134 = scmp.eq.s32.totalorder %s19, 0
    %p135 = por %p133, %p134
    %s137 = sadd.s32 %s136, 1
    %p140 = scmp.eq.s32.totalorder %s13, 1
    %p141 = scmp.ne.s32.totalorder %s136, %s138
    %p142 = scmp.eq.s32.totalorder %s13, 0
    %p143 = por %p141, %p142
    %p144 = scmp.ne.s32.totalorder %s136, %s138
    %p145 = scmp.eq.s32.totalorder %s18, 1
    %p146 = por %p144, %p145
    %p147 = scmp.ne.s32.totalorder %s138, %s139
    %p148 = scmp.eq.s32.totalorder %s18, 0
    %p149 = por %p147, %p148
    %p150 = scmp.ne.s32.totalorder %s138, %s139
    %p151 = scmp.eq.s32.totalorder %s19, 1
    %p152 = por %p150, %p151
    %p154 = scmp.ne.s32.totalorder %s139, %s153
    %p155 = scmp.eq.s32.totalorder %s19, 0
    %p156 = por %p154, %p155
    %s158 = sadd.s32 %s157, 1
    %p161 = scmp.eq.s32.totalorder %s13, 1
    %p162 = scmp.ne.s32.totalorder %s157, %s159
    %p163 = scmp.eq.s32.totalorder %s13, 0
    %p164 = por %p162, %p163
    %p165 = scmp.ne.s32.totalorder %s157, %s159
    %p166 = scmp.eq.s32.totalorder %s18, 1
    %p167 = por %p165, %p166
    %p168 = scmp.ne.s32.totalorder %s159, %s160
    %p169 = scmp.eq.s32.totalorder %s18, 0
    %p170 = por %p168, %p169
    %p171 = scmp.ne.s32.totalorder %s159, %s160
    %p172 = scmp.eq.s32.totalorder %s19, 1
    %p173 = por %p171, %p172
    %p175 = scmp.ne.s32.totalorder %s160, %s174
    %p176 = scmp.eq.s32.totalorder %s19, 0
    %p177 = por %p175, %p176
    %s178 = ssub.s32 %s13, %s20
    %p179 = scmp.eq.s32.totalorder %s178, 0
    %s181 = sadd.s32 %s180, 1
    %s182 = scalar_select %p179, %s180, %s181
    %p185 = pneg %p179
    %p186 = scmp.eq.s32.totalorder %s13, 1
    %p187 = por %p185, %p186
    %p188 = scmp.ne.s32.totalorder %s180, %s183
    %p189 = scmp.eq.s32.totalorder %s13, 0
    %p190 = por %p188, %p189
    %p191 = scmp.ne.s32.totalorder %s180, %s183
    %p192 = scmp.eq.s32.totalorder %s18, 1
    %p193 = por %p191, %p192
    %p194 = scmp.ne.s32.totalorder %s183, %s184
    %p195 = scmp.eq.s32.totalorder %s18, 0
    %p196 = por %p194, %p195
    %p197 = scmp.ne.s32.totalorder %s183, %s184
    %p198 = scmp.eq.s32.totalorder %s19, 1
    %p199 = por %p197, %p198
    %p201 = scmp.ne.s32.totalorder %s184, %s200
    %p202 = scmp.eq.s32.totalorder %s19, 0
    %p203 = por %p201, %p202
    %p204 = scmp.le.s32.totalorder 1, %s13
    %p205 = scmp.lt.s32.totalorder %s13, 3
    %p206 = pnand %p204, %p205
    %p207 = pneg %p206
    // Predicated region
    $region9: #{attention_res_block.4} parent=5 // pred_check
      _
    $region10: #{attention_res_block.4} parent=5 // pred_check_branch
      %209 = sbr.rel (%p206) target = $region12
    $region11: #{attention_res_block.4} parent=5 // pred_region
      %s210 = ssub.s32 %s13, 1
      // Predicated region
      $region13: #{attention_res_block.4} parent=11 // pred_check
        %p211 = pneg %p86
      $region14: #{attention_res_block.4} parent=11 // pred_check_branch
        %213 = sbr.rel (%p211) target = $region16
      $region15: #{attention_res_block.4} parent=11 // pred_region
        _
      $region16: #{attention_res_block.4} parent=11 // pred_fallthru
        _
      // Predicated region
      $region17: #{attention_res_block.4} parent=11 // pred_check
        %p214 = pneg %p107
      $region18: #{attention_res_block.4} parent=11 // pred_check_branch
        %216 = sbr.rel (%p214) target = $region20
      $region19: #{attention_res_block.4} parent=11 // pred_region
        _
      $region20: #{attention_res_block.4} parent=11 // pred_fallthru
        _
      // Predicated region
      $region21: #{attention_res_block.4} parent=11 // pred_check
        %p217 = pneg %p128
      $region22: #{attention_res_block.4} parent=11 // pred_check_branch
        %219 = sbr.rel (%p217) target = $region24
      $region23: #{attention_res_block.4} parent=11 // pred_region
        _
      $region24: #{attention_res_block.4} parent=11 // pred_fallthru
        _
      // Predicated region
      $region25: #{attention_res_block.4} parent=11 // pred_check
        %p220 = pneg %p149
      $region26: #{attention_res_block.4} parent=11 // pred_check_branch
        %222 = sbr.rel (%p220) target = $region28
      $region27: #{attention_res_block.4} parent=11 // pred_region
        _
      $region28: #{attention_res_block.4} parent=11 // pred_fallthru
        _
      // Predicated region
      $region29: #{attention_res_block.4} parent=11 // pred_check
        %p223 = pneg %p170
      $region30: #{attention_res_block.4} parent=11 // pred_check_branch
        %225 = sbr.rel (%p223) target = $region32
      $region31: #{attention_res_block.4} parent=11 // pred_region
        _
      $region32: #{attention_res_block.4} parent=11 // pred_fallthru
        _
    $region12: #{attention_res_block.4} parent=5 // pred_fallthru
      _
    %p226 = scmp.lt.s32.totalorder %s13, 2
    // Predicated region
    $region33: #{attention_res_block.4} parent=5 // pred_check
      %p227 = pneg %p226
    $region34: #{attention_res_block.4} parent=5 // pred_check_branch
      %229 = sbr.rel (%p227) target = $region36
    $region35: #{attention_res_block.4} parent=5 // pred_region
      // Predicated region
      $region37: #{attention_res_block.4} parent=35 // pred_check
        %p230 = pneg %p33
      $region38: #{attention_res_block.4} parent=35 // pred_check_branch
        %232 = sbr.rel (%p230) target = $region40
      $region39: #{attention_res_block.4} parent=35 // pred_region
        %p233 = scmp.lt.s32.totalorder %s13, 1
        %s234 = scalar_select %p233, %s13, 1
        %s235 = smul.addr %s234, 8
        %s236 = smul.addr %s235, 8
        %s237 = scalar_lea.vmem %s0, %s236
      $region40: #{attention_res_block.4} parent=35 // pred_fallthru
        _
      // Predicated region
      $region41: #{attention_res_block.4} parent=35 // pred_check
        %p238 = pneg %p59
      $region42: #{attention_res_block.4} parent=35 // pred_check_branch
        %240 = sbr.rel (%p238) target = $region44
      $region43: #{attention_res_block.4} parent=35 // pred_region
        %p241 = scmp.lt.s32.totalorder %s13, 1
        %s242 = scalar_select %p241, %s13, 1
        %s243 = smul.addr %s242, 8
        %s244 = smul.addr %s243, 8
        %s245 = scalar_lea.vmem %s1, %s244
      $region44: #{attention_res_block.4} parent=35 // pred_fallthru
        _
    $region36: #{attention_res_block.4} parent=5 // pred_fallthru
      _
    %p246 = scmp.le.s32.totalorder 1, %s13
    %p247 = scmp.lt.s32.totalorder %s13, 3
    %p248 = pnand %p246, %p247
    %p249 = pneg %p248
    // Predicated region
    $region45: #{attention_res_block.4} parent=5 // pred_check
      _
    $region46: #{attention_res_block.4} parent=5 // pred_check_branch
      %251 = sbr.rel (%p248) target = $region48
    $region47: #{attention_res_block.4} parent=5 // pred_region
      %s252 = ssub.s32 %s13, 1
      %p253 = scmp.lt.s32.totalorder %s18, 1
      %s254 = scalar_select %p253, %s18, 1
      %s255 = smul.addr %s254, 8
      %s256 = smul.addr %s255, 8
      %s257 = scalar_lea.vmem %s0, %s256
      %p258 = pneg %p39
      %p259 = pneg %p36
      %p260 = scmp.lt.s32.totalorder %s18, 1
      %s261 = scalar_select %p260, %s18, 1
      %s262 = smul.addr %s261, 8
      %s263 = smul.addr %s262, 8
      %s264 = scalar_lea.vmem %s1, %s263
      %p265 = pneg %p65
      %p266 = pneg %p62
      %p267 = pneg %p86
      %p268 = pneg %p83
      %p269 = pneg %p107
      %p270 = pneg %p104
      %p271 = pneg %p128
      %p272 = pneg %p125
      %p273 = pneg %p149
      %p274 = pneg %p146
      %p275 = pneg %p170
      %p276 = pneg %p167
      %p277 = pneg %p196
      %p278 = pneg %p193
      %p279 = scmp.lt.s32.totalorder %s18, 1
      %s280 = scalar_select %p279, %s18, 1
      %s281 = smul.addr %s280, 12
      %s282 = smul.addr %s281, 8
      %s283 = scalar_lea.vmem %s7, %s282
      %p284 = scmp.lt.s32.totalorder %s18, 1
      %s285 = scalar_select %p284, %s18, 1
      %s286 = smul.addr %s285, 8
      %s287 = smul.addr %s286, 8
      %s288 = scalar_lea.vmem %s0, %s287
      %p289 = scmp.lt.s32.totalorder %s18, 1
      %s290 = scalar_select %p289, %s18, 1
      %s291 = smul.addr %s290, 8
      %s292 = smul.addr %s291, 8
      %s293 = scalar_lea.vmem %s1, %s292
      %p294 = scmp.lt.s32.totalorder %s18, 1
      %s295 = scalar_select %p294, %s18, 1
      %s296 = smul.addr %s295, 12
      %s297 = smul.addr %s296, 8
      %s298 = scalar_lea.vmem %s7, %s297
      %v299 = vld [vmem:[%s288] sm:$0xff]
      %v300 = vld [vmem:[%s288 + $0x8] sm:$0xff]
      %v301 = vld [vmem:[%s288 + $0x10] sm:$0xff]
      %v302 = vld [vmem:[%s288 + $0x18] sm:$0xff]
      %v303 = vld [vmem:[%s288 + $0x20] sm:$0xff]
      %v304 = vld [vmem:[%s288 + $0x28] sm:$0xff]
      %v305 = vld [vmem:[%s288 + $0x30] sm:$0xff]
      %v306 = vld [vmem:[%s288 + $0x38] sm:$0xff]
      %v307 = vld [vmem:[%s293] sm:$0xff]
      %v308 = vld [vmem:[%s293 + $0x8] sm:$0xff]
      %v309 = vld [vmem:[%s293 + $0x10] sm:$0xff]
      %v310 = vld [vmem:[%s293 + $0x18] sm:$0xff]
      %v311 = vld [vmem:[%s293 + $0x20] sm:$0xff]
      %v312 = vld [vmem:[%s293 + $0x28] sm:$0xff]
      %v313 = vld [vmem:[%s293 + $0x30] sm:$0xff]
      %v314 = vld [vmem:[%s293 + $0x38] sm:$0xff]
      %v315 = vld [vmem:[%s2] sm:$0xff]
      %v316 = vld [vmem:[%s2 + $0x8] sm:$0xff]
      %v317 = vld [vmem:[%s2 + $0x10] sm:$0xff]
      %v318 = vld [vmem:[%s2 + $0x18] sm:$0xff]
      %vm319 = vcmask 261120
      %v321 = vsel %vm319, %v299, 0
      %v324 = vsel %vm319, %v300, 0
      %v327 = vsel %vm319, %v301, 0
      %v330 = vsel %vm319, %v302, 0
      %v333 = vsel %vm319, %v303, 0
      %v336 = vsel %vm319, %v304, 0
      %v339 = vsel %vm319, %v305, 0
      %v342 = vsel %vm319, %v306, 0
      %344 = vmatpush.msra.mxu0 0.0
      %345 = vmatpush.msra.mxu0 0.0
      %346 = vmatpush.msra.mxu0 0.0
      %347 = vmatpush.msra.mxu0 0.0
      %348 = vmatpush.msra.mxu0 0.0
      %349 = vmatpush.msra.mxu0 0.0
      %350 = vmatpush.msra.mxu0 0.0
      %351 = vmatpush.msra.mxu0 0.0
      %352 = vmatpush.msra.mxu0 0.0
      %353 = vmatpush.msra.mxu0 0.0
      %354 = vmatpush.msra.mxu0 0.0
      %355 = vmatpush.msra.mxu0 0.0
      %356 = vmatpush.msra.mxu0 %v318
      %357 = vmatpush.msra.mxu0 %v317
      %358 = vmatpush.msra.mxu0 %v316
      %359 = vmatpush.msra.mxu0 %v315
      %360 = vmatmul.f32.gmra.mxu0 %v321
      %v361 = vpop.f32.mrf.mxu0
      %v362 = vadd.f32 0.0, %v361
      %363 = vmatmul.f32.gmra.mxu0 %v324
      %v364 = vpop.f32.mrf.mxu0
      %v365 = vadd.f32 0.0, %v364
      %366 = vmatmul.f32.gmra.mxu0 %v327
      %v367 = vpop.f32.mrf.mxu0
      %v368 = vadd.f32 0.0, %v367
      %369 = vmatmul.f32.gmra.mxu0 %v330
      %v370 = vpop.f32.mrf.mxu0
      %v371 = vadd.f32 0.0, %v370
      %372 = vmatmul.f32.gmra.mxu0 %v333
      %v373 = vpop.f32.mrf.mxu0
      %v374 = vadd.f32 0.0, %v373
      %375 = vmatmul.f32.gmra.mxu0 %v336
      %v376 = vpop.f32.mrf.mxu0
      %v377 = vadd.f32 0.0, %v376
      %378 = vmatmul.f32.gmra.mxu0 %v339
      %v379 = vpop.f32.mrf.mxu0
      %v380 = vadd.f32 0.0, %v379
      %381 = vmatmul.f32.gmra.mxu0 %v342
      %v382 = vpop.f32.mrf.mxu0
      %v383 = vadd.f32 0.0, %v382
      %384 = vdwg.mxu0
      %v385 = vld [vmem:[%s3] sm:$0xff]
      %v386 = vld [vmem:[%s3 + $0x8] sm:$0xff]
      %vm387 = vcmask 130048
      %v389 = vsel %vm387, %v307, 0
      %v392 = vsel %vm387, %v308, 0
      %v395 = vsel %vm387, %v309, 0
      %v398 = vsel %vm387, %v310, 0
      %v401 = vsel %vm387, %v311, 0
      %v404 = vsel %vm387, %v312, 0
      %v407 = vsel %vm387, %v313, 0
      %v410 = vsel %vm387, %v314, 0
      %412 = vmatpush.msra.mxu0 0.0
      %413 = vmatpush.msra.mxu0 0.0
      %414 = vmatpush.msra.mxu0 0.0
      %415 = vmatpush.msra.mxu0 0.0
      %416 = vmatpush.msra.mxu0 0.0
      %417 = vmatpush.msra.mxu0 0.0
      %418 = vmatpush.msra.mxu0 0.0
      %419 = vmatpush.msra.mxu0 0.0
      %420 = vmatpush.msra.mxu0 0.0
      %421 = vmatpush.msra.mxu0 0.0
      %422 = vmatpush.msra.mxu0 0.0
      %423 = vmatpush.msra.mxu0 0.0
      %424 = vmatpush.msra.mxu0 0.0
      %425 = vmatpush.msra.mxu0 0.0
      %426 = vmatpush.msra.mxu0 %v386
      %427 = vmatpush.msra.mxu0 %v385
      %428 = vmatmul.f32.gmra.mxu0 %v389
      %v429 = vpop.f32.mrf.mxu0
      %v430 = vadd.f32 0.0, %v429
      %431 = vmatmul.f32.gmra.mxu0 %v392
      %v432 = vpop.f32.mrf.mxu0
      %v433 = vadd.f32 0.0, %v432
      %434 = vmatmul.f32.gmra.mxu0 %v395
      %v435 = vpop.f32.mrf.mxu0
      %v436 = vadd.f32 0.0, %v435
      %437 = vmatmul.f32.gmra.mxu0 %v398
      %v438 = vpop.f32.mrf.mxu0
      %v439 = vadd.f32 0.0, %v438
      %440 = vmatmul.f32.gmra.mxu0 %v401
      %v441 = vpop.f32.mrf.mxu0
      %v442 = vadd.f32 0.0, %v441
      %443 = vmatmul.f32.gmra.mxu0 %v404
      %v444 = vpop.f32.mrf.mxu0
      %v445 = vadd.f32 0.0, %v444
      %446 = vmatmul.f32.gmra.mxu0 %v407
      %v447 = vpop.f32.mrf.mxu0
      %v448 = vadd.f32 0.0, %v447
      %449 = vmatmul.f32.gmra.mxu0 %v410
      %v450 = vpop.f32.mrf.mxu0
      %v451 = vadd.f32 0.0, %v450
      %452 = vdwg.mxu0
      %v453 = vld [vmem:[%s4] sm:$0xf]
      %v455 = vsel %vm387, %v453, 0
      %457 = vmatpush.msra.mxu0 0.0
      %458 = vmatpush.msra.mxu0 0.0
      %459 = vmatpush.msra.mxu0 0.0
      %460 = vmatpush.msra.mxu0 0.0
      %461 = vmatpush.msra.mxu0 0.0
      %462 = vmatpush.msra.mxu0 0.0
      %463 = vmatpush.msra.mxu0 0.0
      %464 = vmatpush.msra.mxu0 0.0
      %465 = vmatpush.msra.mxu0 0.0
      %466 = vmatpush.msra.mxu0 0.0
      %467 = vmatpush.msra.mxu0 0.0
      %468 = vmatpush.msra.mxu0 0.0
      %469 = vmatpush.msra.mxu0 0.0
      %470 = vmatpush.msra.mxu0 0.0
      %471 = vmatpush.msra.mxu0 %v365
      %472 = vmatpush.msra.mxu0 %v362
      %473 = vmatmul.f32.gmra.mxu0 %v455
      %v474 = vpop.f32.mrf.mxu0
      %v475 = vadd.f32 0.0, %v474
      %476 = vdwg.mxu0
      %477 = vmatpush.msra.mxu0 0.0
      %478 = vmatpush.msra.mxu0 0.0
      %479 = vmatpush.msra.mxu0 0.0
      %480 = vmatpush.msra.mxu0 0.0
      %481 = vmatpush.msra.mxu0 0.0
      %482 = vmatpush.msra.mxu0 0.0
      %483 = vmatpush.msra.mxu0 0.0
      %484 = vmatpush.msra.mxu0 0.0
      %485 = vmatpush.msra.mxu0 0.0
      %486 = vmatpush.msra.mxu0 0.0
      %487 = vmatpush.msra.mxu0 0.0
      %488 = vmatpush.msra.mxu0 0.0
      %489 = vmatpush.msra.mxu0 0.0
      %490 = vmatpush.msra.mxu0 0.0
      %491 = vmatpush.msra.mxu0 %v371
      %492 = vmatpush.msra.mxu0 %v368
      %493 = vmatmul.f32.gmra.mxu0 %v455
      %v494 = vpop.f32.mrf.mxu0
      %v495 = vadd.f32 0.0, %v494
      %496 = vdwg.mxu0
      %497 = vmatpush.msra.mxu0 0.0
      %498 = vmatpush.msra.mxu0 0.0
      %499 = vmatpush.msra.mxu0 0.0
      %500 = vmatpush.msra.mxu0 0.0
      %501 = vmatpush.msra.mxu0 0.0
      %502 = vmatpush.msra.mxu0 0.0
      %503 = vmatpush.msra.mxu0 0.0
      %504 = vmatpush.msra.mxu0 0.0
      %505 = vmatpush.msra.mxu0 0.0
      %506 = vmatpush.msra.mxu0 0.0
      %507 = vmatpush.msra.mxu0 0.0
      %508 = vmatpush.msra.mxu0 0.0
      %509 = vmatpush.msra.mxu0 0.0
      %510 = vmatpush.msra.mxu0 0.0
      %511 = vmatpush.msra.mxu0 %v377
      %512 = vmatpush.msra.mxu0 %v374
      %513 = vmatmul.f32.gmra.mxu0 %v455
      %v514 = vpop.f32.mrf.mxu0
      %v515 = vadd.f32 0.0, %v514
      %516 = vdwg.mxu0
      %517 = vmatpush.msra.mxu0 0.0
      %518 = vmatpush.msra.mxu0 0.0
      %519 = vmatpush.msra.mxu0 0.0
      %520 = vmatpush.msra.mxu0 0.0
      %521 = vmatpush.msra.mxu0 0.0
      %522 = vmatpush.msra.mxu0 0.0
      %523 = vmatpush.msra.mxu0 0.0
      %524 = vmatpush.msra.mxu0 0.0
      %525 = vmatpush.msra.mxu0 0.0
      %526 = vmatpush.msra.mxu0 0.0
      %527 = vmatpush.msra.mxu0 0.0
      %528 = vmatpush.msra.mxu0 0.0
      %529 = vmatpush.msra.mxu0 0.0
      %530 = vmatpush.msra.mxu0 0.0
      %531 = vmatpush.msra.mxu0 %v383
      %532 = vmatpush.msra.mxu0 %v380
      %533 = vmatmul.f32.gmra.mxu0 %v455
      %v534 = vpop.f32.mrf.mxu0
      %v535 = vadd.f32 0.0, %v534
      %536 = vdwg.mxu0
      %537 = vmatpush.msra.mxu0 0.0
      %538 = vmatpush.msra.mxu0 0.0
      %539 = vmatpush.msra.mxu0 0.0
      %540 = vmatpush.msra.mxu0 0.0
      %541 = vmatpush.msra.mxu0 0.0
      %542 = vmatpush.msra.mxu0 0.0
      %543 = vmatpush.msra.mxu0 0.0
      %544 = vmatpush.msra.mxu0 0.0
      %545 = vmatpush.msra.mxu0 0.0
      %546 = vmatpush.msra.mxu0 0.0
      %547 = vmatpush.msra.mxu0 0.0
      %548 = vmatpush.msra.mxu0 0.0
      %549 = vmatpush.msra.mxu0 0.0
      %550 = vmatpush.msra.mxu0 0.0
      %551 = vmatpush.msra.mxu0 %v433
      %552 = vmatpush.msra.mxu0 %v430
      %553 = vmatmul.f32.gmra.mxu0 %v455
      %v554 = vpop.f32.mrf.mxu0
      %v555 = vadd.f32 0.0, %v554
      %556 = vdwg.mxu0
      %557 = vmatpush.msra.mxu0 0.0
      %558 = vmatpush.msra.mxu0 0.0
      %559 = vmatpush.msra.mxu0 0.0
      %560 = vmatpush.msra.mxu0 0.0
      %561 = vmatpush.msra.mxu0 0.0
      %562 = vmatpush.msra.mxu0 0.0
      %563 = vmatpush.msra.mxu0 0.0
      %564 = vmatpush.msra.mxu0 0.0
      %565 = vmatpush.msra.mxu0 0.0
      %566 = vmatpush.msra.mxu0 0.0
      %567 = vmatpush.msra.mxu0 0.0
      %568 = vmatpush.msra.mxu0 0.0
      %569 = vmatpush.msra.mxu0 0.0
      %570 = vmatpush.msra.mxu0 0.0
      %571 = vmatpush.msra.mxu0 %v439
      %572 = vmatpush.msra.mxu0 %v436
      %573 = vmatmul.f32.gmra.mxu0 %v455
      %v574 = vpop.f32.mrf.mxu0
      %v575 = vadd.f32 0.0, %v574
      %576 = vdwg.mxu0
      %577 = vmatpush.msra.mxu0 0.0
      %578 = vmatpush.msra.mxu0 0.0
      %579 = vmatpush.msra.mxu0 0.0
      %580 = vmatpush.msra.mxu0 0.0
      %581 = vmatpush.msra.mxu0 0.0
      %582 = vmatpush.msra.mxu0 0.0
      %583 = vmatpush.msra.mxu0 0.0
      %584 = vmatpush.msra.mxu0 0.0
      %585 = vmatpush.msra.mxu0 0.0
      %586 = vmatpush.msra.mxu0 0.0
      %587 = vmatpush.msra.mxu0 0.0
      %588 = vmatpush.msra.mxu0 0.0
      %589 = vmatpush.msra.mxu0 0.0
      %590 = vmatpush.msra.mxu0 0.0
      %591 = vmatpush.msra.mxu0 %v445
      %592 = vmatpush.msra.mxu0 %v442
      %593 = vmatmul.f32.gmra.mxu0 %v455
      %v594 = vpop.f32.mrf.mxu0
      %v595 = vadd.f32 0.0, %v594
      %596 = vdwg.mxu0
      %597 = vmatpush.msra.mxu0 0.0
      %598 = vmatpush.msra.mxu0 0.0
      %599 = vmatpush.msra.mxu0 0.0
      %600 = vmatpush.msra.mxu0 0.0
      %601 = vmatpush.msra.mxu0 0.0
      %602 = vmatpush.msra.mxu0 0.0
      %603 = vmatpush.msra.mxu0 0.0
      %604 = vmatpush.msra.mxu0 0.0
      %605 = vmatpush.msra.mxu0 0.0
      %606 = vmatpush.msra.mxu0 0.0
      %607 = vmatpush.msra.mxu0 0.0
      %608 = vmatpush.msra.mxu0 0.0
      %609 = vmatpush.msra.mxu0 0.0
      %610 = vmatpush.msra.mxu0 0.0
      %611 = vmatpush.msra.mxu0 %v451
      %612 = vmatpush.msra.mxu0 %v448
      %613 = vmatmul.f32.gmra.mxu0 %v455
      %v614 = vpop.f32.mrf.mxu0
      %v615 = vadd.f32 0.0, %v614
      %616 = vdwg.mxu0
      %v621 = vrot.slane %v495, 7
      %vm622 = vcmask 1041409
      %v623 = vsel %vm622, %v621, %v475
      %v624 = vrot.slane %v515, 6
      %vm625 = vcmask 1042434
      %v626 = vsel %vm625, %v624, %v623
      %v627 = vrot.slane %v535, 5
      %vm628 = vcmask 1043459
      %v629 = vsel %vm628, %v627, %v626
      %vm631 = vcmask 27648
      %632 = vst.msk [vmem:[#allocation2] sm:$0xf] %vm631, %v629
      %v637 = vrot.slane %v575, 7
      %v638 = vsel %vm622, %v637, %v555
      %v639 = vrot.slane %v595, 6
      %v640 = vsel %vm625, %v639, %v638
      %v641 = vrot.slane %v615, 5
      %v642 = vsel %vm628, %v641, %v640
      %644 = vst.msk [vmem:[#allocation3] sm:$0xf] %vm631, %v642
      %v645 = vsel %vm625, %v621, %v475
      %v646 = vsel %vm628, %v624, %v645
      %vm647 = vcmask 1044484
      %v648 = vsel %vm647, %v627, %v646
      %649 = vrot.lane.b32.xlu0 %v648, 4
      %v650 = vpop.permute.xlu0 %649
      %vm652 = vcmask 61473
      %653 = vst.msk [vmem:[#allocation2 - $0x1] sm:$0x1e] %vm652, %v650
      %v654 = vsel %vm625, %v637, %v555
      %v655 = vsel %vm628, %v639, %v654
      %v656 = vsel %vm647, %v641, %v655
      %657 = vrot.lane.b32.xlu0 %v656, 4
      %v658 = vpop.permute.xlu0 %657
      %660 = vst.msk [vmem:[#allocation3 - $0x1] sm:$0x1e] %vm652, %v658
      %v661 = vsel %vm628, %v621, %v475
      %v662 = vsel %vm647, %v624, %v661
      %vm663 = vcmask 1045509
      %v664 = vsel %vm663, %v627, %v662
      %665 = vrot.lane.b32.xlu0 %v664, 8
      %v666 = vpop.permute.xlu0 %665
      %vm668 = vcmask 95298
      %669 = vst.msk [vmem:[#allocation2 - $0x2] sm:$0x3c] %vm668, %v666
      %v670 = vsel %vm628, %v637, %v555
      %v671 = vsel %vm647, %v639, %v670
      %v672 = vsel %vm663, %v641, %v671
      %673 = vrot.lane.b32.xlu0 %v672, 8
      %v674 = vpop.permute.xlu0 %673
      %676 = vst.msk [vmem:[#allocation3 - $0x2] sm:$0x3c] %vm668, %v674
      %v677 = vsel %vm647, %v621, %v475
      %v678 = vsel %vm663, %v624, %v677
      %vm679 = vcmask 1046534
      %v680 = vsel %vm679, %v627, %v678
      %681 = vrot.lane.b32.xlu0 %v680, 12
      %v682 = vpop.permute.xlu0 %681
      %vm684 = vcmask 129123
      %685 = vst.msk [vmem:[#allocation2 - $0x3] sm:$0x78] %vm684, %v682
      %v686 = vsel %vm647, %v637, %v555
      %v687 = vsel %vm663, %v639, %v686
      %v688 = vsel %vm679, %v641, %v687
      %689 = vrot.lane.b32.xlu0 %v688, 12
      %v690 = vpop.permute.xlu0 %689
      %692 = vst.msk [vmem:[#allocation3 - $0x3] sm:$0x78] %vm684, %v690
      %v693 = vld [vmem:[#allocation2] sm:$0xf]
      %v694 = vld [vmem:[#allocation3] sm:$0xf]
      %695 = vxpose.xlu0.b32.start [1/16] %v694, 128
      %696 = vxpose.xlu0.b32.cont [2/16] 0.0, 128
      %697 = vxpose.xlu0.b32.cont [3/16] 0.0, 128
      %698 = vxpose.xlu0.b32.cont [4/16] 0.0, 128
      %699 = vxpose.xlu0.b32.cont [5/16] 0.0, 128
      %700 = vxpose.xlu0.b32.cont [6/16] 0.0, 128
      %701 = vxpose.xlu0.b32.cont [7/16] 0.0, 128
      %702 = vxpose.xlu0.b32.cont [8/16] 0.0, 128
      %703 = vxpose.xlu0.b32.cont [9/16] 0.0, 128
      %704 = vxpose.xlu0.b32.cont [10/16] 0.0, 128
      %705 = vxpose.xlu0.b32.cont [11/16] 0.0, 128
      %706 = vxpose.xlu0.b32.cont [12/16] 0.0, 128
      %707 = vxpose.xlu0.b32.cont [13/16] 0.0, 128
      %708 = vxpose.xlu0.b32.cont [14/16] 0.0, 128
      %709 = vxpose.xlu0.b32.cont [15/16] 0.0, 128
      %710 = vxpose.xlu0.b32.end [16/16] 0.0, 128
      %v711 = vpop.trf.xlu0
      %v712 = vpop.trf.xlu0
      %v713 = vpop.trf.xlu0
      %v714 = vpop.trf.xlu0
      %v715 = vpop.trf.xlu0
      %v716 = vpop.trf.xlu0
      %v717 = vpop.trf.xlu0
      %v718 = vpop.trf.xlu0
      %v719 = vpop.trf.xlu0
      %v720 = vpop.trf.xlu0
      %v721 = vpop.trf.xlu0
      %v722 = vpop.trf.xlu0
      %v723 = vpop.trf.xlu0
      %v724 = vpop.trf.xlu0
      %v725 = vpop.trf.xlu0
      %v726 = vpop.trf.xlu0
      %vm727 = vcmask 31744
      %v729 = vsel %vm727, %v711, 0
      %v732 = vsel %vm727, %v712, 0
      %vm734 = vcmask 1043456
      %v736 = vsel %vm734, %v693, 0
      %738 = vmatpush.msra.mxu0 0.0
      %739 = vmatpush.msra.mxu0 0.0
      %740 = vmatpush.msra.mxu0 0.0
      %741 = vmatpush.msra.mxu0 0.0
      %742 = vmatpush.msra.mxu0 0.0
      %743 = vmatpush.msra.mxu0 0.0
      %744 = vmatpush.msra.mxu0 0.0
      %745 = vmatpush.msra.mxu0 0.0
      %746 = vmatpush.msra.mxu0 0.0
      %747 = vmatpush.msra.mxu0 0.0
      %748 = vmatpush.msra.mxu0 0.0
      %749 = vmatpush.msra.mxu0 0.0
      %750 = vmatpush.msra.mxu0 0.0
      %751 = vmatpush.msra.mxu0 0.0
      %752 = vmatpush.msra.mxu0 0.0
      %753 = vmatpush.msra.mxu0 %v736
      %754 = vmatmul.f32.gmra.mxu0 %v729
      %v755 = vpop.f32.mrf.mxu0
      %v756 = vadd.f32 0.0, %v755
      %757 = vmatmul.f32.gmra.mxu0 %v732
      %v758 = vpop.f32.mrf.mxu0
      %v759 = vadd.f32 0.0, %v758
      %760 = vdwg.mxu0
      %v761 = vsel %vm387, %v756, -inf
      %v762 = vsel %vm387, %v759, -inf
      %v763 = vmax.f32 %v761, %v762
      %v764 = vrot.slane %v763, 4
      %v765 = vmax.f32 %v763, %v764
      %v766 = vrot.slane %v765, 2
      %v767 = vmax.f32 %v765, %v766
      %v768 = vrot.slane %v767, 1
      %v769 = vmax.f32 %v767, %v768
      %v770 = vsub.f32 %v756, %v769
      %v771 = vsub.f32 %v759, %v769
      %v772 = vmul.f32 %v770, 1.442695
      %v773 = vpow.pop %v772
      %v774 = vmul.f32 %v771, 1.442695
      %v775 = vpow.pop %v774
      %v776 = vsel %vm387, %v773, 0.0
      %v777 = vsel %vm387, %v775, 0.0
      %v778 = vadd.f32 %v776, %v777
      %v779 = vrot.slane %v778, 4
      %v780 = vadd.f32 %v778, %v779
      %v781 = vrot.slane %v780, 2
      %v782 = vadd.f32 %v780, %v781
      %v783 = vrot.slane %v782, 1
      %v784 = vadd.f32 %v782, %v783
      %v785 = vrcp.pop %v784
      %v786 = vmul.f32 %v784, %v785
      %v787 = vsub.f32 2.0, %v786
      %v788 = vmul.f32 %v785, %v787
      %v789 = vmul.f32 %v773, %v788
      %v790 = vmul.f32 %v775, %v788
      %v792 = vsel %vm387, %v694, 0
      %794 = vmatpush.msra.mxu0 0.0
      %795 = vmatpush.msra.mxu0 0.0
      %796 = vmatpush.msra.mxu0 0.0
      %797 = vmatpush.msra.mxu0 0.0
      %798 = vmatpush.msra.mxu0 0.0
      %799 = vmatpush.msra.mxu0 0.0
      %800 = vmatpush.msra.mxu0 0.0
      %801 = vmatpush.msra.mxu0 0.0
      %802 = vmatpush.msra.mxu0 0.0
      %803 = vmatpush.msra.mxu0 0.0
      %804 = vmatpush.msra.mxu0 0.0
      %805 = vmatpush.msra.mxu0 0.0
      %806 = vmatpush.msra.mxu0 0.0
      %807 = vmatpush.msra.mxu0 0.0
      %808 = vmatpush.msra.mxu0 %v790
      %809 = vmatpush.msra.mxu0 %v789
      %810 = vmatmul.f32.gmra.mxu0 %v792
      %v811 = vpop.f32.mrf.mxu0
      %v812 = vadd.f32 0.0, %v811
      %813 = vdwg.mxu0
      %v815 = vrot.slane %v812, 1
      %v816 = vrot.slane %v812, 2
      %v817 = vrot.slane %v812, 3
      %vm821 = vcmask 24576
      %822 = vst.msk [vmem:[#allocation4] sm:$0x1] %vm821, %v812
      %823 = vst.msk [vmem:[#allocation4 + $0x4] sm:$0x1] %vm821, %v815
      %824 = vst.msk [vmem:[#allocation4 + $0x8] sm:$0x1] %vm821, %v816
      %825 = vst.msk [vmem:[#allocation4 + $0xc] sm:$0x1] %vm821, %v817
      %v826 = vperm.slane %v812, 0
      %v827 = vperm.slane %v815, 0
      %v828 = vperm.slane %v816, 0
      %v829 = vperm.slane %v817, 0
      %830 = vrot.lane.b32.xlu0 %v826, 124
      %v831 = vpop.permute.xlu0 %830
      %832 = vrot.lane.b32.xlu0 %v827, 124
      %v833 = vpop.permute.xlu0 %832
      %834 = vrot.lane.b32.xlu0 %v828, 124
      %v835 = vpop.permute.xlu0 %834
      %836 = vrot.lane.b32.xlu0 %v829, 124
      %v837 = vpop.permute.xlu0 %836
      %842 = vst.msk [vmem:[#allocation4 + $0x1] sm:$0x1] %vm821, %v831
      %843 = vst.msk [vmem:[#allocation4 + $0x5] sm:$0x1] %vm821, %v833
      %844 = vst.msk [vmem:[#allocation4 + $0x9] sm:$0x1] %vm821, %v835
      %845 = vst.msk [vmem:[#allocation4 + $0xd] sm:$0x1] %vm821, %v837
      %846 = vrot.lane.b32.xlu0 %v826, 120
      %v847 = vpop.permute.xlu0 %846
      %848 = vrot.lane.b32.xlu0 %v827, 120
      %v849 = vpop.permute.xlu0 %848
      %850 = vrot.lane.b32.xlu0 %v828, 120
      %v851 = vpop.permute.xlu0 %850
      %852 = vrot.lane.b32.xlu0 %v829, 120
      %v853 = vpop.permute.xlu0 %852
      %858 = vst.msk [vmem:[#allocation4 + $0x2] sm:$0x1] %vm821, %v847
      %859 = vst.msk [vmem:[#allocation4 + $0x6] sm:$0x1] %vm821, %v849
      %860 = vst.msk [vmem:[#allocation4 + $0xa] sm:$0x1] %vm821, %v851
      %861 = vst.msk [vmem:[#allocation4 + $0xe] sm:$0x1] %vm821, %v853
      %862 = vrot.lane.b32.xlu0 %v826, 116
      %v863 = vpop.permute.xlu0 %862
      %864 = vrot.lane.b32.xlu0 %v827, 116
      %v865 = vpop.permute.xlu0 %864
      %866 = vrot.lane.b32.xlu0 %v828, 116
      %v867 = vpop.permute.xlu0 %866
      %868 = vrot.lane.b32.xlu0 %v829, 116
      %v869 = vpop.permute.xlu0 %868
      %874 = vst.msk [vmem:[#allocation4 + $0x3] sm:$0x1] %vm821, %v863
      %875 = vst.msk [vmem:[#allocation4 + $0x7] sm:$0x1] %vm821, %v865
      %876 = vst.msk [vmem:[#allocation4 + $0xb] sm:$0x1] %vm821, %v867
      %877 = vst.msk [vmem:[#allocation4 + $0xf] sm:$0x1] %vm821, %v869
      %v878 = vld [vmem:[%s5] sm:$0xff]
      %v879 = vld [vmem:[%s5 + $0x8] sm:$0xff]
      %v880 = vld [vmem:[#allocation4] sm:$0xf]
      %v881 = vld [vmem:[#allocation4 + $0x4] sm:$0xf]
      %v882 = vld [vmem:[#allocation4 + $0x8] sm:$0xf]
      %v883 = vld [vmem:[#allocation4 + $0xc] sm:$0xf]
      %v885 = vsel %vm727, %v878, 0
      %v888 = vsel %vm727, %v879, 0
      %v891 = vsel %vm734, %v880, 0
      %893 = vmatpush.msra.mxu0 0.0
      %894 = vmatpush.msra.mxu0 0.0
      %895 = vmatpush.msra.mxu0 0.0
      %896 = vmatpush.msra.mxu0 0.0
      %897 = vmatpush.msra.mxu0 0.0
      %898 = vmatpush.msra.mxu0 0.0
      %899 = vmatpush.msra.mxu0 0.0
      %900 = vmatpush.msra.mxu0 0.0
      %901 = vmatpush.msra.mxu0 0.0
      %902 = vmatpush.msra.mxu0 0.0
      %903 = vmatpush.msra.mxu0 0.0
      %904 = vmatpush.msra.mxu0 0.0
      %905 = vmatpush.msra.mxu0 0.0
      %906 = vmatpush.msra.mxu0 0.0
      %907 = vmatpush.msra.mxu0 0.0
      %908 = vmatpush.msra.mxu0 %v891
      %909 = vmatmul.f32.gmra.mxu0 %v885
      %v910 = vpop.f32.mrf.mxu0
      %v911 = vadd.f32 0.0, %v910
      %912 = vmatmul.f32.gmra.mxu0 %v888
      %v913 = vpop.f32.mrf.mxu0
      %v914 = vadd.f32 0.0, %v913
      %915 = vdwg.mxu0
      %v917 = vsel %vm734, %v881, 0
      %919 = vmatpush.msra.mxu0 0.0
      %920 = vmatpush.msra.mxu0 0.0
      %921 = vmatpush.msra.mxu0 0.0
      %922 = vmatpush.msra.mxu0 0.0
      %923 = vmatpush.msra.mxu0 0.0
      %924 = vmatpush.msra.mxu0 0.0
      %925 = vmatpush.msra.mxu0 0.0
      %926 = vmatpush.msra.mxu0 0.0
      %927 = vmatpush.msra.mxu0 0.0
      %928 = vmatpush.msra.mxu0 0.0
      %929 = vmatpush.msra.mxu0 0.0
      %930 = vmatpush.msra.mxu0 0.0
      %931 = vmatpush.msra.mxu0 0.0
      %932 = vmatpush.msra.mxu0 0.0
      %933 = vmatpush.msra.mxu0 0.0
      %934 = vmatpush.msra.mxu0 %v917
      %935 = vmatmul.f32.gmra.mxu0 %v885
      %v936 = vpop.f32.mrf.mxu0
      %v937 = vadd.f32 0.0, %v936
      %938 = vmatmul.f32.gmra.mxu0 %v888
      %v939 = vpop.f32.mrf.mxu0
      %v940 = vadd.f32 0.0, %v939
      %941 = vdwg.mxu0
      %v943 = vsel %vm734, %v882, 0
      %945 = vmatpush.msra.mxu0 0.0
      %946 = vmatpush.msra.mxu0 0.0
      %947 = vmatpush.msra.mxu0 0.0
      %948 = vmatpush.msra.mxu0 0.0
      %949 = vmatpush.msra.mxu0 0.0
      %950 = vmatpush.msra.mxu0 0.0
      %951 = vmatpush.msra.mxu0 0.0
      %952 = vmatpush.msra.mxu0 0.0
      %953 = vmatpush.msra.mxu0 0.0
      %954 = vmatpush.msra.mxu0 0.0
      %955 = vmatpush.msra.mxu0 0.0
      %956 = vmatpush.msra.mxu0 0.0
      %957 = vmatpush.msra.mxu0 0.0
      %958 = vmatpush.msra.mxu0 0.0
      %959 = vmatpush.msra.mxu0 0.0
      %960 = vmatpush.msra.mxu0 %v943
      %961 = vmatmul.f32.gmra.mxu0 %v885
      %v962 = vpop.f32.mrf.mxu0
      %v963 = vadd.f32 0.0, %v962
      %964 = vmatmul.f32.gmra.mxu0 %v888
      %v965 = vpop.f32.mrf.mxu0
      %v966 = vadd.f32 0.0, %v965
      %967 = vdwg.mxu0
      %v969 = vsel %vm734, %v883, 0
      %971 = vmatpush.msra.mxu0 0.0
      %972 = vmatpush.msra.mxu0 0.0
      %973 = vmatpush.msra.mxu0 0.0
      %974 = vmatpush.msra.mxu0 0.0
      %975 = vmatpush.msra.mxu0 0.0
      %976 = vmatpush.msra.mxu0 0.0
      %977 = vmatpush.msra.mxu0 0.0
      %978 = vmatpush.msra.mxu0 0.0
      %979 = vmatpush.msra.mxu0 0.0
      %980 = vmatpush.msra.mxu0 0.0
      %981 = vmatpush.msra.mxu0 0.0
      %982 = vmatpush.msra.mxu0 0.0
      %983 = vmatpush.msra.mxu0 0.0
      %984 = vmatpush.msra.mxu0 0.0
      %985 = vmatpush.msra.mxu0 0.0
      %986 = vmatpush.msra.mxu0 %v969
      %987 = vmatmul.f32.gmra.mxu0 %v885
      %v988 = vpop.f32.mrf.mxu0
      %v989 = vadd.f32 0.0, %v988
      %990 = vmatmul.f32.gmra.mxu0 %v888
      %v991 = vpop.f32.mrf.mxu0
      %v992 = vadd.f32 0.0, %v991
      %993 = vdwg.mxu0
      %v994 = vld [vmem:[%s6] sm:$0xf]
      %v996 = vsel %vm727, %v911, 0
      %v999 = vsel %vm727, %v914, 0
      %v1002 = vsel %vm727, %v937, 0
      %v1005 = vsel %vm727, %v940, 0
      %v1008 = vsel %vm727, %v963, 0
      %v1011 = vsel %vm727, %v966, 0
      %v1014 = vsel %vm727, %v989, 0
      %v1017 = vsel %vm727, %v992, 0
      %v1020 = vsel %vm734, %v994, 0
      %1022 = vmatpush.msra.mxu0 0.0
      %1023 = vmatpush.msra.mxu0 0.0
      %1024 = vmatpush.msra.mxu0 0.0
      %1025 = vmatpush.msra.mxu0 0.0
      %1026 = vmatpush.msra.mxu0 0.0
      %1027 = vmatpush.msra.mxu0 0.0
      %1028 = vmatpush.msra.mxu0 0.0
      %1029 = vmatpush.msra.mxu0 0.0
      %1030 = vmatpush.msra.mxu0 0.0
      %1031 = vmatpush.msra.mxu0 0.0
      %1032 = vmatpush.msra.mxu0 0.0
      %1033 = vmatpush.msra.mxu0 0.0
      %1034 = vmatpush.msra.mxu0 0.0
      %1035 = vmatpush.msra.mxu0 0.0
      %1036 = vmatpush.msra.mxu0 0.0
      %1037 = vmatpush.msra.mxu0 %v1020
      %1038 = vmatmul.f32.gmra.mxu0 %v996
      %v1039 = vpop.f32.mrf.mxu0
      %v1040 = vadd.f32 0.0, %v1039
      %1041 = vmatmul.f32.gmra.mxu0 %v999
      %v1042 = vpop.f32.mrf.mxu0
      %v1043 = vadd.f32 0.0, %v1042
      %1044 = vmatmul.f32.gmra.mxu0 %v1002
      %v1045 = vpop.f32.mrf.mxu0
      %v1046 = vadd.f32 0.0, %v1045
      %1047 = vmatmul.f32.gmra.mxu0 %v1005
      %v1048 = vpop.f32.mrf.mxu0
      %v1049 = vadd.f32 0.0, %v1048
      %1050 = vmatmul.f32.gmra.mxu0 %v1008
      %v1051 = vpop.f32.mrf.mxu0
      %v1052 = vadd.f32 0.0, %v1051
      %1053 = vmatmul.f32.gmra.mxu0 %v1011
      %v1054 = vpop.f32.mrf.mxu0
      %v1055 = vadd.f32 0.0, %v1054
      %1056 = vmatmul.f32.gmra.mxu0 %v1014
      %v1057 = vpop.f32.mrf.mxu0
      %v1058 = vadd.f32 0.0, %v1057
      %1059 = vmatmul.f32.gmra.mxu0 %v1017
      %v1060 = vpop.f32.mrf.mxu0
      %v1061 = vadd.f32 0.0, %v1060
      %1062 = vdwg.mxu0
      %v1063 = vadd.f32 %v299, %v1040
      %v1064 = vadd.f32 %v300, %v1043
      %v1065 = vadd.f32 %v301, %v1046
      %v1066 = vadd.f32 %v302, %v1049
      %v1067 = vadd.f32 %v303, %v1052
      %v1068 = vadd.f32 %v304, %v1055
      %v1069 = vadd.f32 %v305, %v1058
      %v1070 = vadd.f32 %v306, %v1061
      %1079 = vrot.lane.b32.xlu0 %v1063, 1
      %v1080 = vpop.permute.xlu0 %1079
      %1081 = vrot.lane.b32.xlu0 %v1064, 1
      %v1082 = vpop.permute.xlu0 %1081
      %1083 = vrot.lane.b32.xlu0 %v1065, 1
      %v1084 = vpop.permute.xlu0 %1083
      %1085 = vrot.lane.b32.xlu0 %v1066, 1
      %v1086 = vpop.permute.xlu0 %1085
      %1087 = vrot.lane.b32.xlu0 %v1067, 1
      %v1088 = vpop.permute.xlu0 %1087
      %1089 = vrot.lane.b32.xlu0 %v1068, 1
      %v1090 = vpop.permute.xlu0 %1089
      %1091 = vrot.lane.b32.xlu0 %v1069, 1
      %v1092 = vpop.permute.xlu0 %1091
      %1093 = vrot.lane.b32.xlu0 %v1070, 1
      %v1094 = vpop.permute.xlu0 %1093
      %vm1103 = vcmask 7168
      %v1104 = vsel %vm1103, 0.0, %v1080
      %v1105 = vsel %vm1103, 0.0, %v1082
      %v1106 = vsel %vm1103, 0.0, %v1084
      %v1107 = vsel %vm1103, 0.0, %v1086
      %v1108 = vsel %vm1103, 0.0, %v1088
      %v1109 = vsel %vm1103, 0.0, %v1090
      %v1110 = vsel %vm1103, 0.0, %v1092
      %v1111 = vsel %vm1103, 0.0, %v1094
      %vm1112 = vcmask 138240
      %v1113 = vsel %vm1112, %v1104, 0.0
      %v1114 = vsel %vm1112, %v1105, 0.0
      %v1115 = vsel %vm1112, %v1106, 0.0
      %v1116 = vsel %vm1112, %v1107, 0.0
      %v1117 = vsel %vm1112, %v1108, 0.0
      %v1118 = vsel %vm1112, %v1109, 0.0
      %v1119 = vsel %vm1112, %v1110, 0.0
      %v1120 = vsel %vm1112, %v1111, 0.0
      %vm1121 = vcmask 253952
      %1122 = vst.msk [vmem:[%s298] sm:$0x1] %vm1121, 0.0
      %1123 = vst.msk [vmem:[%s298 + $0x18] sm:$0x1] %vm1121, 0.0
      %1124 = vst.msk [vmem:[%s298 + $0x30] sm:$0x1] %vm1121, 0.0
      %1125 = vst.msk [vmem:[%s298 + $0x48] sm:$0x1] %vm1121, 0.0
      %1126 = vst.msk [vmem:[%s298 + $0x1] sm:$0xff] %vm319, %v1113
      %1127 = vst.msk [vmem:[%s298 + $0x9] sm:$0xff] %vm319, %v1114
      %1128 = vst.msk [vmem:[%s298 + $0x19] sm:$0xff] %vm319, %v1115
      %1129 = vst.msk [vmem:[%s298 + $0x21] sm:$0xff] %vm319, %v1116
      %1130 = vst.msk [vmem:[%s298 + $0x31] sm:$0xff] %vm319, %v1117
      %1131 = vst.msk [vmem:[%s298 + $0x39] sm:$0xff] %vm319, %v1118
      %1132 = vst.msk [vmem:[%s298 + $0x49] sm:$0xff] %vm319, %v1119
      %1133 = vst.msk [vmem:[%s298 + $0x51] sm:$0xff] %vm319, %v1120
      %vm1134 = vcmask 260096
      %1135 = vst.msk [vmem:[%s298 + $0x11] sm:$0x7f] %vm1134, 0.0
      %1136 = vst.msk [vmem:[%s298 + $0x29] sm:$0x7f] %vm1134, 0.0
      %1137 = vst.msk [vmem:[%s298 + $0x41] sm:$0x7f] %vm1134, 0.0
      %1138 = vst.msk [vmem:[%s298 + $0x59] sm:$0x7f] %vm1134, 0.0
      %p1139 = scmp.lt.s32.totalorder %s18, 1
      %s1140 = scalar_select %p1139, %s18, 1
      %s1141 = smul.addr %s1140, 12
      %s1142 = smul.addr %s1141, 8
      %s1143 = scalar_lea.vmem %s7, %s1142
      // Predicated region
      $region49: #{attention_res_block.4} parent=47 // pred_check
        %p1144 = pneg %p193
      $region50: #{attention_res_block.4} parent=47 // pred_check_branch
        %1146 = sbr.rel (%p1144) target = $region52
      $region51: #{attention_res_block.4} parent=47 // pred_region
        _
      $region52: #{attention_res_block.4} parent=47 // pred_fallthru
        _
    $region48: #{attention_res_block.4} parent=5 // pred_fallthru
      _
    %p1147 = scmp.le.s32.totalorder 2, %s13
    // Predicated region
    $region53: #{attention_res_block.4} parent=5 // pred_check
      %p1148 = pneg %p1147
    $region54: #{attention_res_block.4} parent=5 // pred_check_branch
      %1150 = sbr.rel (%p1148) target = $region56
    $region55: #{attention_res_block.4} parent=5 // pred_region
      %s1151 = ssub.s32 %s13, 2
      // Predicated region
      $region57: #{attention_res_block.4} parent=55 // pred_check
        %p1152 = pneg %p199
      $region58: #{attention_res_block.4} parent=55 // pred_check_branch
        %1154 = sbr.rel (%p1152) target = $region60
      $region59: #{attention_res_block.4} parent=55 // pred_region
        %p1155 = scmp.lt.s32.totalorder %s19, 1
        %s1156 = scalar_select %p1155, %s19, 1
        %s1157 = smul.addr %s1156, 12
        %s1158 = smul.addr %s1157, 8
        %s1159 = scalar_lea.vmem %s7, %s1158
      $region60: #{attention_res_block.4} parent=55 // pred_fallthru
        _
    $region56: #{attention_res_block.4} parent=5 // pred_fallthru
      _
  $region6: #{attention_res_block.4} parent=0 // loop_footer
    %s17 = sadd.s32 1, %s13
  $region7: #{attention_res_block.4} parent=0 // loop_footer_branch
    %12 = sbr.rel target = $region3
  $region8: #{attention_res_block.4} parent=0 // loop_exit
    _

</llo_original>
